<compile_context>
chip_gen: v6e
topology: v6e:2x2x1
jax: 0.10.0
libtpu: 0.0.40
codegen_flags: <defaults>
</compile_context>

<pallas_src>
import functools

import jax
import jax.numpy as jnp
from jax.experimental import pallas as pl
from jax.experimental.pallas import tpu as pltpu


def _gnn_mix_kernel(n_layers,
                    qs_ref,      # (tile, P)        packed agent-q rows
                    rhs_ref,     # (n_layers, P, P) kron(I_G, w_i * adj^T)
                    bias_ref,    # (n_layers, P)    b_i * rowsum(adj), tiled per graph
                    e_ref,       # (P, P*R)         kron(I_P, w_r) readout expansion
                    br_ref,      # (1, P*R)         readout bias, tiled per node
                    out_ref):    # (tile, P*R)
    x = qs_ref[...]                                        # f32, lane-dense
    for i in range(n_layers):                              # static unroll over GNN layers
        h = jnp.dot(x, rhs_ref[i], preferred_element_type=jnp.float32)
        x = jnp.maximum(h + bias_ref[pl.ds(i, 1), :], 0.0)
    q = jnp.dot(x, e_ref[...], preferred_element_type=jnp.float32) + br_ref[...]
    out_ref[...] = q.astype(out_ref.dtype)


def _round_up(x, m):
    return ((x + m - 1) // m) * m


def centralized_mixing_gnn_forward(agent_qs, states, adj_matrix, params, *,
                                   n_agents, state_dim, mixing_dim, readout_dim,
                                   tile_rows=128, out_dtype=jnp.float32):
    """agent_qs: (bs, ..., n_agents) -> q_total: (bs, -1, readout_dim)."""
    assert state_dim == 1 and mixing_dim == 1, (
        "the original forward only type-checks for state_dim == mixing_dim == 1")
    del states  # reshaped then never used by the original forward

    layer_w, layer_b, w_r, b_r = params
    A, R = n_agents, readout_dim
    # Graphs packed per 128-lane row (falls back to 1 if A does not divide 128).
    G = 128 // A if (A <= 128 and 128 % A == 0) else 1
    P = G * A
    bs = agent_qs.shape[0]
    B = agent_qs.size // A                                 # graphs after view(-1, A, 1)

    # ---- fold per-layer scalar affine into the mixing matmul (wrapper-side, one-time) ----
    adj = jnp.asarray(adj_matrix, jnp.float32)             # (A, A)
    lw = layer_w.reshape(A).astype(jnp.float32)            # per-layer scalar weight
    lb = layer_b.reshape(A).astype(jnp.float32)            # per-layer scalar bias
    rowsum = jnp.sum(adj, axis=1)                          # (A,) -- NOT assumed to be 1
    base = jnp.kron(jnp.eye(G, dtype=jnp.float32), adj.T)  # (P, P) block-diag per graph
    rhs = lw[:, None, None] * base[None, :, :]             # (n_layers, P, P)
    bias = lb[:, None] * jnp.tile(rowsum, G)[None, :]      # (n_layers, P)

    # Readout fused with (node, feature) flattening: out[b, p*R + r] = x[b, p]*w_r[r] + b_r[r]
    e_mat = jnp.kron(jnp.eye(P, dtype=jnp.float32),
                     w_r.astype(jnp.float32).reshape(1, R))            # (P, P*R)
    br_row = jnp.tile(b_r.astype(jnp.float32).reshape(1, R), (1, P))   # (1, P*R)

    # ---- packed-row tiling ----
    Bp = pl.cdiv(B, G)                                     # packed rows needed
    # Cap the tile so the grid has >= 2 steps when possible (uses both TCs on v7x).
    tile = max(8, min(int(tile_rows), _round_up(pl.cdiv(Bp, 2), 8)))
    tile = (tile // 8) * 8
    if Bp % 8 == 0:
        # Prefer a tile that divides Bp: no padded tail -> no post-kernel slice copy.
        t = tile
        while t > 8 and Bp % t != 0:
            t -= 8
        if Bp % t == 0:
            tile = t
    num_tiles = pl.cdiv(Bp, tile)
    Bp_pad = num_tiles * tile

    qs2 = agent_qs.reshape(B, A).astype(jnp.float32)
    pad_graphs = Bp_pad * G - B
    if pad_graphs:
        qs2 = jnp.pad(qs2, ((0, pad_graphs), (0, 0)))
    qs_packed = qs2.reshape(Bp_pad, P)                     # row-major pack: free reshape

    kernel = functools.partial(_gnn_mix_kernel, n_agents)

    out = pl.pallas_call(
        kernel,
        out_shape=jax.ShapeDtypeStruct((Bp_pad, P * R), out_dtype),
        grid_spec=pltpu.PrefetchScalarGridSpec(
            num_scalar_prefetch=0,
            grid=(num_tiles,),
            in_specs=[
                pl.BlockSpec((tile, P), lambda i: (i, 0)),            # packed q rows
                pl.BlockSpec((A, P, P), lambda i: (0, 0, 0)),         # per-layer RHS
                pl.BlockSpec((A, P), lambda i: (0, 0)),               # per-layer bias
                pl.BlockSpec((P, P * R), lambda i: (0, 0)),           # readout expansion
                pl.BlockSpec((1, P * R), lambda i: (0, 0)),           # readout bias
            ],
            out_specs=pl.BlockSpec((tile, P * R), lambda i: (i, 0)),
        ),
        compiler_params=pltpu.CompilerParams(
            dimension_semantics=("parallel",)),
    )(qs_packed, rhs, bias, e_mat, br_row)

    q = out.reshape(Bp_pad * G, A * R)                     # unpack graphs: free reshape
    if pad_graphs:
        q = q[:B]
    return q.reshape(bs, -1, R)


def init_params(key, n_agents, state_dim, mixing_dim, readout_dim):
    """Synthetic params matching the PyTorch parameter shapes."""
    ks = jax.random.split(key, 4)
    layer_w = jax.random.uniform(ks[0], (n_agents, mixing_dim, state_dim),
                                 jnp.float32, 0.5, 1.0)
    layer_b = jax.random.uniform(ks[1], (n_agents, mixing_dim), jnp.float32, 0.0, 0.5)
    w_r = 0.5 * jax.random.normal(ks[2], (readout_dim, mixing_dim), jnp.float32)
    b_r = 0.5 * jax.random.normal(ks[3], (readout_dim,), jnp.float32)
    return layer_w, layer_b, w_r, b_r


def reference_forward(agent_qs, states, adj_matrix, params, *, n_agents, state_dim,
                      mixing_dim, readout_dim):
    """Pure-JAX mirror of the PyTorch forward for validation."""
    layer_w, layer_b, w_r, b_r = params
    bs = agent_qs.shape[0]
    _ = states.reshape(-1, state_dim)                       # mirrors the unused reshape
    adj = jnp.asarray(adj_matrix, jnp.float32)
    x = agent_qs.reshape(-1, n_agents, 1).astype(jnp.float32)
    for i in range(n_agents):
        h = x @ layer_w[i].T + layer_b[i]                   # Linear(state_dim, mixing_dim)
        h = jnp.einsum('ij,bjm->bim', adj, h)               # adj_matrix @ h
        x = jnp.maximum(h, 0.0)                             # ReLU
    q = x @ w_r.T + b_r                                     # readout_layer
    return q.reshape(bs, -1, readout_dim)


if __name__ == "__main__":
    n_agents, state_dim, mixing_dim, readout_dim = 8, 1, 1, 16
    bs, T = 2, 64                                           # 128 graph rows -> 8 packed rows

    key = jax.random.PRNGKey(0)
    k_p, k_q, k_s, k_a = jax.random.split(key, 4)
    params = init_params(k_p, n_agents, state_dim, mixing_dim, readout_dim)
    agent_qs = jax.random.normal(k_q, (bs, T, n_agents), dtype=jnp.float32)
    states = jax.random.normal(k_s, (bs, T, state_dim), dtype=jnp.float32)
    adj = (jax.random.uniform(k_a, (n_agents, n_agents)) > 0.5).astype(jnp.float32)
    adj = adj + jnp.eye(n_agents, dtype=jnp.float32)        # self-loops
    adj = adj / jnp.sum(adj, axis=1, keepdims=True)         # row-normalized mixing

    q_tot = centralized_mixing_gnn_forward(
        agent_qs, states, adj, params,
        n_agents=n_agents, state_dim=state_dim, mixing_dim=mixing_dim,
        readout_dim=readout_dim)
    q_tot = jax.block_until_ready(q_tot)

    q_ref = reference_forward(
        agent_qs, states, adj, params,
        n_agents=n_agents, state_dim=state_dim, mixing_dim=mixing_dim,
        readout_dim=readout_dim)

    assert q_tot.shape == (bs, T * n_agents, readout_dim)
    assert jnp.allclose(q_tot, q_ref, atol=1e-4, rtol=1e-4), "mismatch vs reference"
    print("KERNEL_OK")
</pallas_src>

<mosaic_0001>
module attributes {stable_mosaic.version = 11 : i64} {
  func.func @_gnn_mix_kernel(%arg0: i32, %arg1: memref<8x128xf32, #tpu.memory_space<vmem>>, %arg2: memref<8x128x128xf32, #tpu.memory_space<vmem>>, %arg3: memref<8x128xf32, #tpu.memory_space<vmem>>, %arg4: memref<128x2048xf32, #tpu.memory_space<vmem>>, %arg5: memref<1x2048xf32, #tpu.memory_space<vmem>>, %arg6: memref<8x2048xf32, #tpu.memory_space<vmem>>) attributes {dimension_semantics = [#tpu.dimension_semantics<parallel>], iteration_bounds = array<i64: 1>, scalar_prefetch = 0 : i64, scratch_operands = 0 : i64, tpu.core_type = #tpu.core_type<tc>, window_params = [{transform_indices = @transform_0, window_bounds = array<i64: 8, 128>}, {pipeline_mode = #tpu.pipeline_mode<synchronous>, transform_indices = @transform_1, window_bounds = array<i64: 8, 128, 128>}, {pipeline_mode = #tpu.pipeline_mode<synchronous>, transform_indices = @transform_2, window_bounds = array<i64: 8, 128>}, {pipeline_mode = #tpu.pipeline_mode<synchronous>, transform_indices = @transform_3, window_bounds = array<i64: 128, 2048>}, {pipeline_mode = #tpu.pipeline_mode<synchronous>, transform_indices = @transform_4, window_bounds = array<i64: 1, 2048>}, {transform_indices = @transform_5, window_bounds = array<i64: 8, 2048>}]} {
    %c0 = arith.constant 0 : index
    %c0_0 = arith.constant 0 : index
    %0 = vector.load %arg1[%c0, %c0_0] : memref<8x128xf32, #tpu.memory_space<vmem>>, vector<8x128xf32>
    %c0_1 = arith.constant 0 : index
    %c0_2 = arith.constant 0 : index
    %c0_3 = arith.constant 0 : index
    %1 = vector.load %arg2[%c0_1, %c0_2, %c0_3] : memref<8x128x128xf32, #tpu.memory_space<vmem>>, vector<1x128x128xf32>
    %2 = vector.shape_cast %1 : vector<1x128x128xf32> to vector<128x128xf32>
    %cst = arith.constant dense<0.000000e+00> : vector<8x128xf32>
    %3 = tpu.matmul %0, %2, %cst {dimension_numbers = #tpu.dot_dimension_numbers<[1], [0], [0], [1], [0, 0, 1, 1], [], []>} : vector<8x128xf32>, vector<128x128xf32>, vector<8x128xf32> -> vector<8x128xf32>
    %c0_4 = arith.constant 0 : index
    %c0_5 = arith.constant 0 : index
    %4 = vector.load %arg3[%c0_4, %c0_5] : memref<8x128xf32, #tpu.memory_space<vmem>>, vector<1x128xf32>
    %5 = vector.broadcast %4 : vector<1x128xf32> to vector<8x128xf32>
    %6 = arith.addf %3, %5 : vector<8x128xf32>
    %cst_6 = arith.constant 0.000000e+00 : f32
    %7 = vector.broadcast %cst_6 : f32 to vector<8x128xf32>
    %8 = arith.maximumf %6, %7 : vector<8x128xf32>
    %c1 = arith.constant 1 : index
    %c0_7 = arith.constant 0 : index
    %c0_8 = arith.constant 0 : index
    %9 = vector.load %arg2[%c1, %c0_7, %c0_8] : memref<8x128x128xf32, #tpu.memory_space<vmem>>, vector<1x128x128xf32>
    %10 = vector.shape_cast %9 : vector<1x128x128xf32> to vector<128x128xf32>
    %cst_9 = arith.constant dense<0.000000e+00> : vector<8x128xf32>
    %11 = tpu.matmul %8, %10, %cst_9 {dimension_numbers = #tpu.dot_dimension_numbers<[1], [0], [0], [1], [0, 0, 1, 1], [], []>} : vector<8x128xf32>, vector<128x128xf32>, vector<8x128xf32> -> vector<8x128xf32>
    %c1_10 = arith.constant 1 : index
    %c0_11 = arith.constant 0 : index
    %12 = vector.load %arg3[%c1_10, %c0_11] : memref<8x128xf32, #tpu.memory_space<vmem>>, vector<1x128xf32>
    %13 = vector.broadcast %12 : vector<1x128xf32> to vector<8x128xf32>
    %14 = arith.addf %11, %13 : vector<8x128xf32>
    %cst_12 = arith.constant 0.000000e+00 : f32
    %15 = vector.broadcast %cst_12 : f32 to vector<8x128xf32>
    %16 = arith.maximumf %14, %15 : vector<8x128xf32>
    %c2 = arith.constant 2 : index
    %c0_13 = arith.constant 0 : index
    %c0_14 = arith.constant 0 : index
    %17 = vector.load %arg2[%c2, %c0_13, %c0_14] : memref<8x128x128xf32, #tpu.memory_space<vmem>>, vector<1x128x128xf32>
    %18 = vector.shape_cast %17 : vector<1x128x128xf32> to vector<128x128xf32>
    %cst_15 = arith.constant dense<0.000000e+00> : vector<8x128xf32>
    %19 = tpu.matmul %16, %18, %cst_15 {dimension_numbers = #tpu.dot_dimension_numbers<[1], [0], [0], [1], [0, 0, 1, 1], [], []>} : vector<8x128xf32>, vector<128x128xf32>, vector<8x128xf32> -> vector<8x128xf32>
    %c2_16 = arith.constant 2 : index
    %c0_17 = arith.constant 0 : index
    %20 = vector.load %arg3[%c2_16, %c0_17] : memref<8x128xf32, #tpu.memory_space<vmem>>, vector<1x128xf32>
    %21 = vector.broadcast %20 : vector<1x128xf32> to vector<8x128xf32>
    %22 = arith.addf %19, %21 : vector<8x128xf32>
    %cst_18 = arith.constant 0.000000e+00 : f32
    %23 = vector.broadcast %cst_18 : f32 to vector<8x128xf32>
    %24 = arith.maximumf %22, %23 : vector<8x128xf32>
    %c3 = arith.constant 3 : index
    %c0_19 = arith.constant 0 : index
    %c0_20 = arith.constant 0 : index
    %25 = vector.load %arg2[%c3, %c0_19, %c0_20] : memref<8x128x128xf32, #tpu.memory_space<vmem>>, vector<1x128x128xf32>
    %26 = vector.shape_cast %25 : vector<1x128x128xf32> to vector<128x128xf32>
    %cst_21 = arith.constant dense<0.000000e+00> : vector<8x128xf32>
    %27 = tpu.matmul %24, %26, %cst_21 {dimension_numbers = #tpu.dot_dimension_numbers<[1], [0], [0], [1], [0, 0, 1, 1], [], []>} : vector<8x128xf32>, vector<128x128xf32>, vector<8x128xf32> -> vector<8x128xf32>
    %c3_22 = arith.constant 3 : index
    %c0_23 = arith.constant 0 : index
    %28 = vector.load %arg3[%c3_22, %c0_23] : memref<8x128xf32, #tpu.memory_space<vmem>>, vector<1x128xf32>
    %29 = vector.broadcast %28 : vector<1x128xf32> to vector<8x128xf32>
    %30 = arith.addf %27, %29 : vector<8x128xf32>
    %cst_24 = arith.constant 0.000000e+00 : f32
    %31 = vector.broadcast %cst_24 : f32 to vector<8x128xf32>
    %32 = arith.maximumf %30, %31 : vector<8x128xf32>
    %c4 = arith.constant 4 : index
    %c0_25 = arith.constant 0 : index
    %c0_26 = arith.constant 0 : index
    %33 = vector.load %arg2[%c4, %c0_25, %c0_26] : memref<8x128x128xf32, #tpu.memory_space<vmem>>, vector<1x128x128xf32>
    %34 = vector.shape_cast %33 : vector<1x128x128xf32> to vector<128x128xf32>
    %cst_27 = arith.constant dense<0.000000e+00> : vector<8x128xf32>
    %35 = tpu.matmul %32, %34, %cst_27 {dimension_numbers = #tpu.dot_dimension_numbers<[1], [0], [0], [1], [0, 0, 1, 1], [], []>} : vector<8x128xf32>, vector<128x128xf32>, vector<8x128xf32> -> vector<8x128xf32>
    %c4_28 = arith.constant 4 : index
    %c0_29 = arith.constant 0 : index
    %36 = vector.load %arg3[%c4_28, %c0_29] : memref<8x128xf32, #tpu.memory_space<vmem>>, vector<1x128xf32>
    %37 = vector.broadcast %36 : vector<1x128xf32> to vector<8x128xf32>
    %38 = arith.addf %35, %37 : vector<8x128xf32>
    %cst_30 = arith.constant 0.000000e+00 : f32
    %39 = vector.broadcast %cst_30 : f32 to vector<8x128xf32>
    %40 = arith.maximumf %38, %39 : vector<8x128xf32>
    %c5 = arith.constant 5 : index
    %c0_31 = arith.constant 0 : index
    %c0_32 = arith.constant 0 : index
    %41 = vector.load %arg2[%c5, %c0_31, %c0_32] : memref<8x128x128xf32, #tpu.memory_space<vmem>>, vector<1x128x128xf32>
    %42 = vector.shape_cast %41 : vector<1x128x128xf32> to vector<128x128xf32>
    %cst_33 = arith.constant dense<0.000000e+00> : vector<8x128xf32>
    %43 = tpu.matmul %40, %42, %cst_33 {dimension_numbers = #tpu.dot_dimension_numbers<[1], [0], [0], [1], [0, 0, 1, 1], [], []>} : vector<8x128xf32>, vector<128x128xf32>, vector<8x128xf32> -> vector<8x128xf32>
    %c5_34 = arith.constant 5 : index
    %c0_35 = arith.constant 0 : index
    %44 = vector.load %arg3[%c5_34, %c0_35] : memref<8x128xf32, #tpu.memory_space<vmem>>, vector<1x128xf32>
    %45 = vector.broadcast %44 : vector<1x128xf32> to vector<8x128xf32>
    %46 = arith.addf %43, %45 : vector<8x128xf32>
    %cst_36 = arith.constant 0.000000e+00 : f32
    %47 = vector.broadcast %cst_36 : f32 to vector<8x128xf32>
    %48 = arith.maximumf %46, %47 : vector<8x128xf32>
    %c6 = arith.constant 6 : index
    %c0_37 = arith.constant 0 : index
    %c0_38 = arith.constant 0 : index
    %49 = vector.load %arg2[%c6, %c0_37, %c0_38] : memref<8x128x128xf32, #tpu.memory_space<vmem>>, vector<1x128x128xf32>
    %50 = vector.shape_cast %49 : vector<1x128x128xf32> to vector<128x128xf32>
    %cst_39 = arith.constant dense<0.000000e+00> : vector<8x128xf32>
    %51 = tpu.matmul %48, %50, %cst_39 {dimension_numbers = #tpu.dot_dimension_numbers<[1], [0], [0], [1], [0, 0, 1, 1], [], []>} : vector<8x128xf32>, vector<128x128xf32>, vector<8x128xf32> -> vector<8x128xf32>
    %c6_40 = arith.constant 6 : index
    %c0_41 = arith.constant 0 : index
    %52 = vector.load %arg3[%c6_40, %c0_41] : memref<8x128xf32, #tpu.memory_space<vmem>>, vector<1x128xf32>
    %53 = vector.broadcast %52 : vector<1x128xf32> to vector<8x128xf32>
    %54 = arith.addf %51, %53 : vector<8x128xf32>
    %cst_42 = arith.constant 0.000000e+00 : f32
    %55 = vector.broadcast %cst_42 : f32 to vector<8x128xf32>
    %56 = arith.maximumf %54, %55 : vector<8x128xf32>
    %c7 = arith.constant 7 : index
    %c0_43 = arith.constant 0 : index
    %c0_44 = arith.constant 0 : index
    %57 = vector.load %arg2[%c7, %c0_43, %c0_44] : memref<8x128x128xf32, #tpu.memory_space<vmem>>, vector<1x128x128xf32>
    %58 = vector.shape_cast %57 : vector<1x128x128xf32> to vector<128x128xf32>
    %cst_45 = arith.constant dense<0.000000e+00> : vector<8x128xf32>
    %59 = tpu.matmul %56, %58, %cst_45 {dimension_numbers = #tpu.dot_dimension_numbers<[1], [0], [0], [1], [0, 0, 1, 1], [], []>} : vector<8x128xf32>, vector<128x128xf32>, vector<8x128xf32> -> vector<8x128xf32>
    %c7_46 = arith.constant 7 : index
    %c0_47 = arith.constant 0 : index
    %60 = vector.load %arg3[%c7_46, %c0_47] : memref<8x128xf32, #tpu.memory_space<vmem>>, vector<1x128xf32>
    %61 = vector.broadcast %60 : vector<1x128xf32> to vector<8x128xf32>
    %62 = arith.addf %59, %61 : vector<8x128xf32>
    %cst_48 = arith.constant 0.000000e+00 : f32
    %63 = vector.broadcast %cst_48 : f32 to vector<8x128xf32>
    %64 = arith.maximumf %62, %63 : vector<8x128xf32>
    %c0_49 = arith.constant 0 : index
    %c0_50 = arith.constant 0 : index
    %65 = vector.load %arg4[%c0_49, %c0_50] : memref<128x2048xf32, #tpu.memory_space<vmem>>, vector<128x2048xf32>
    %cst_51 = arith.constant dense<0.000000e+00> : vector<8x2048xf32>
    %66 = tpu.matmul %64, %65, %cst_51 {dimension_numbers = #tpu.dot_dimension_numbers<[1], [0], [0], [1], [0, 0, 1, 1], [], []>} : vector<8x128xf32>, vector<128x2048xf32>, vector<8x2048xf32> -> vector<8x2048xf32>
    %c0_52 = arith.constant 0 : index
    %c0_53 = arith.constant 0 : index
    %67 = vector.load %arg5[%c0_52, %c0_53] : memref<1x2048xf32, #tpu.memory_space<vmem>>, vector<1x2048xf32>
    %68 = vector.broadcast %67 : vector<1x2048xf32> to vector<8x2048xf32>
    %69 = arith.addf %66, %68 : vector<8x2048xf32>
    %c0_54 = arith.constant 0 : index
    %c0_55 = arith.constant 0 : index
    %70 = vector.load %arg6[%c0_54, %c0_55] : memref<8x2048xf32, #tpu.memory_space<vmem>>, vector<8x2048xf32>
    tpu.vector_store %arg6[%c0_54, %c0_55], %69 {strides = array<i32>} : memref<8x2048xf32, #tpu.memory_space<vmem>>, vector<8x2048xf32>,
    return
  }
  func.func @transform_0(%arg0: i32) -> (i32, i32) {
    %c0_i32 = arith.constant 0 : i32
    %c0_i32_0 = arith.constant 0 : i32
    return %arg0, %c0_i32 : i32, i32
  }
  func.func @transform_1(%arg0: i32) -> (i32, i32, i32) {
    %c0_i32 = arith.constant 0 : i32
    %c0_i32_0 = arith.constant 0 : i32
    %c0_i32_1 = arith.constant 0 : i32
    %c0_i32_2 = arith.constant 0 : i32
    return %c0_i32, %c0_i32_0, %c0_i32_1 : i32, i32, i32
  }
  func.func @transform_2(%arg0: i32) -> (i32, i32) {
    %c0_i32 = arith.constant 0 : i32
    %c0_i32_0 = arith.constant 0 : i32
    %c0_i32_1 = arith.constant 0 : i32
    return %c0_i32, %c0_i32_0 : i32, i32
  }
  func.func @transform_3(%arg0: i32) -> (i32, i32) {
    %c0_i32 = arith.constant 0 : i32
    %c0_i32_0 = arith.constant 0 : i32
    %c0_i32_1 = arith.constant 0 : i32
    return %c0_i32, %c0_i32_0 : i32, i32
  }
  func.func @transform_4(%arg0: i32) -> (i32, i32) {
    %c0_i32 = arith.constant 0 : i32
    %c0_i32_0 = arith.constant 0 : i32
    %c0_i32_1 = arith.constant 0 : i32
    return %c0_i32, %c0_i32_0 : i32, i32
  }
  func.func @transform_5(%arg0: i32) -> (i32, i32) {
    %c0_i32 = arith.constant 0 : i32
    %c0_i32_0 = arith.constant 0 : i32
    return %arg0, %c0_i32 : i32, i32
  }
}

</mosaic_0001>

<llo_original>
// kernel: tpu_custom_call.1
$region0: #{tpu_custom_call.1}
  #allocation0 [shape = 'u32[]', space=smem, size = 0x4, offset = 0x4, fixed_abs, tag = 'smem constant byte address 0x4 - core index']
  #allocation1 [shape = 'u32[144,128]{1,0:T(1,128)}', space=vmem, size = 0x12000, scoped, tag = 'internal scratch']
  %s0 = inlined_call_operand.hbm [shape: f32[8,128], index: 0, kind: input, shape index: {}]
  %s1 = inlined_call_operand.hbm [shape: f32[8,128,128], index: 1, kind: input, shape index: {}]
  %s2 = inlined_call_operand.hbm [shape: f32[8,128], index: 2, kind: input, shape index: {}]
  %s3 = inlined_call_operand.hbm [shape: f32[128,2048], index: 3, kind: input, shape index: {}]
  %s4 = inlined_call_operand.hbm [shape: f32[1,2048], index: 4, kind: input, shape index: {}]
  %s5 = inlined_call_operand.hbm [shape: f32[8,2048], index: 5, kind: output, shape index: {}]
  %s6 = sld [smem:[#allocation0]]
  $region50: #{tpu_custom_call.1} parent=0
    _
  %s8 = ssub.s32 1, %s6
  %s9 = scalar_select 0, %s8, %s6
  $region1: #{tpu_custom_call.1} parent=0
    #allocation2 [shape = 'u8[4096]{0}', space=vmem, size = 0x1000, scoped, tag = 'input window, operand 0, single buffered']
    #allocation3 [shape = 's32[1]{0}', space=sflag, size = 0x4, scoped, tag = 'scoped memory for tpu_custom_call.1']
    #allocation4 [shape = 's32[1]{0}', space=sflag, size = 0x4, scoped, tag = 'scoped memory for tpu_custom_call.1']
    #allocation5 [shape = 'u8[524288]{0}', space=vmem, size = 0x80000, scoped, tag = 'input window, operand 1, single buffered']
    #allocation6 [shape = 's32[1]{0}', space=sflag, size = 0x4, scoped, tag = 'scoped memory for tpu_custom_call.1']
    #allocation7 [shape = 'u8[4096]{0}', space=vmem, size = 0x1000, scoped, tag = 'input window, operand 2, single buffered']
    #allocation8 [shape = 'u8[1048576]{0}', space=vmem, size = 0x100000, scoped, tag = 'input window, operand 3, single buffered']
    #allocation9 [shape = 's32[1]{0}', space=sflag, size = 0x4, scoped, tag = 'scoped memory for tpu_custom_call.1']
    #allocation10 [shape = 'u8[8192]{0}', space=vmem, size = 0x2000, scoped, tag = 'input window, operand 4, single buffered']
    #allocation11 [shape = 'u8[65536]{0}', space=vmem, size = 0x10000, scoped, tag = 'output window, operand 0, single buffered']
    %10 = vsyncpa [#allocation3], 0
    %11 = vsyncpa [#allocation6], 0
    %12 = vsyncpa [#allocation9], 0
    %13 = vsyncpa [#allocation4], 0
    // Predicated region
    $region2: #{tpu_custom_call.1} parent=1 // pred_check
      _
    $region3: #{tpu_custom_call.1} parent=1 // pred_check_branch
      %15 = sbr.rel (0) target = $region5
    $region4: #{tpu_custom_call.1} parent=1 // pred_region
      %s17 = ssub.s32 128, 128
      %18 = vsyncadd [#allocation3], %s17
      %s20 = sshll.u32 [#allocation2], 4
      %s21 = int_to_ptr.vmem [resolvable:$true] %s20
      %23 = dma.hbm_to_vmem [thread:$0]  %s0, 128, %s21, [#allocation3]
    $region5: #{tpu_custom_call.1} parent=1 // pred_fallthru
      _
    // Predicated region
    $region6: #{tpu_custom_call.1} parent=1 // pred_check
      _
    $region7: #{tpu_custom_call.1} parent=1 // pred_check_branch
      %25 = sbr.rel (0) target = $region9
    $region8: #{tpu_custom_call.1} parent=1 // pred_region
      %s27 = ssub.s32 16384, 16384
      %28 = vsyncadd [#allocation6], %s27
      %s29 = sshll.u32 [#allocation5], 4
      %s30 = int_to_ptr.vmem [resolvable:$true] %s29
      %35 = dma.hbm_to_vmem [thread:$0]  %s1, 16384, %s30, [#allocation6], 128, 128, 8
    $region9: #{tpu_custom_call.1} parent=1 // pred_fallthru
      _
    // Predicated region
    $region10: #{tpu_custom_call.1} parent=1 // pred_check
      _
    $region11: #{tpu_custom_call.1} parent=1 // pred_check_branch
      %37 = sbr.rel (0) target = $region13
    $region12: #{tpu_custom_call.1} parent=1 // pred_region
      %s39 = ssub.s32 128, 128
      %40 = vsyncadd [#allocation6], %s39
      %s42 = sshll.u32 [#allocation7], 4
      %s43 = int_to_ptr.vmem [resolvable:$true] %s42
      %45 = dma.hbm_to_vmem [thread:$0]  %s2, 128, %s43, [#allocation6]
    $region13: #{tpu_custom_call.1} parent=1 // pred_fallthru
      _
    // Predicated region
    $region14: #{tpu_custom_call.1} parent=1 // pred_check
      _
    $region15: #{tpu_custom_call.1} parent=1 // pred_check_branch
      %47 = sbr.rel (0) target = $region17
    $region16: #{tpu_custom_call.1} parent=1 // pred_region
      %s49 = ssub.s32 32768, 32768
      %50 = vsyncadd [#allocation9], %s49
      %s51 = sshll.u32 [#allocation8], 4
      %s52 = int_to_ptr.vmem [resolvable:$true] %s51
      %57 = dma.hbm_to_vmem [thread:$0]  %s3, 32768, %s52, [#allocation9], 2048, 2048, 128
    $region17: #{tpu_custom_call.1} parent=1 // pred_fallthru
      _
    // Predicated region
    $region18: #{tpu_custom_call.1} parent=1 // pred_check
      _
    $region19: #{tpu_custom_call.1} parent=1 // pred_check_branch
      %59 = sbr.rel (0) target = $region21
    $region20: #{tpu_custom_call.1} parent=1 // pred_region
      %s61 = ssub.s32 256, 256
      %62 = vsyncadd [#allocation9], %s61
      %s64 = sshll.u32 [#allocation10], 4
      %s65 = int_to_ptr.vmem [resolvable:$true] %s64
      %67 = dma.hbm_to_vmem [thread:$0]  %s4, 256, %s65, [#allocation9]
    $region21: #{tpu_custom_call.1} parent=1 // pred_fallthru
      _
    // Predicated region
    $region22: #{tpu_custom_call.1} parent=1 // pred_check
      _
    $region23: #{tpu_custom_call.1} parent=1 // pred_check_branch
      %69 = sbr.rel (0) target = $region25
    $region24: #{tpu_custom_call.1} parent=1 // pred_region
      %70 = dma.done [#allocation3], 128
    $region25: #{tpu_custom_call.1} parent=1 // pred_fallthru
      _
    // Predicated region
    $region26: #{tpu_custom_call.1} parent=1 // pred_check
      _
    $region27: #{tpu_custom_call.1} parent=1 // pred_check_branch
      %72 = sbr.rel (0) target = $region29
    $region28: #{tpu_custom_call.1} parent=1 // pred_region
      %73 = dma.done [#allocation6], 16384
    $region29: #{tpu_custom_call.1} parent=1 // pred_fallthru
      _
    // Predicated region
    $region30: #{tpu_custom_call.1} parent=1 // pred_check
      _
    $region31: #{tpu_custom_call.1} parent=1 // pred_check_branch
      %75 = sbr.rel (0) target = $region33
    $region32: #{tpu_custom_call.1} parent=1 // pred_region
      %76 = dma.done [#allocation6], 128
    $region33: #{tpu_custom_call.1} parent=1 // pred_fallthru
      _
    // Predicated region
    $region34: #{tpu_custom_call.1} parent=1 // pred_check
      _
    $region35: #{tpu_custom_call.1} parent=1 // pred_check_branch
      %78 = sbr.rel (0) target = $region37
    $region36: #{tpu_custom_call.1} parent=1 // pred_region
      %79 = dma.done [#allocation9], 32768
    $region37: #{tpu_custom_call.1} parent=1 // pred_fallthru
      _
    // Predicated region
    $region38: #{tpu_custom_call.1} parent=1 // pred_check
      _
    $region39: #{tpu_custom_call.1} parent=1 // pred_check_branch
      %81 = sbr.rel (0) target = $region41
    $region40: #{tpu_custom_call.1} parent=1 // pred_region
      %82 = dma.done [#allocation9], 256
    $region41: #{tpu_custom_call.1} parent=1 // pred_fallthru
      _
    %v83 = vld [vmem:[#allocation2] sm:$0xff]
    %v84 = vld [vmem:[#allocation5] sm:$0xff]
    %v85 = vld [vmem:[#allocation5 + $0x8] sm:$0xff]
    %v86 = vld [vmem:[#allocation5 + $0x10] sm:$0xff]
    %v87 = vld [vmem:[#allocation5 + $0x18] sm:$0xff]
    %v88 = vld [vmem:[#allocation5 + $0x20] sm:$0xff]
    %v89 = vld [vmem:[#allocation5 + $0x28] sm:$0xff]
    %v90 = vld [vmem:[#allocation5 + $0x30] sm:$0xff]
    %v91 = vld [vmem:[#allocation5 + $0x38] sm:$0xff]
    %v92 = vld [vmem:[#allocation5 + $0x40] sm:$0xff]
    %v93 = vld [vmem:[#allocation5 + $0x48] sm:$0xff]
    %v94 = vld [vmem:[#allocation5 + $0x50] sm:$0xff]
    %v95 = vld [vmem:[#allocation5 + $0x58] sm:$0xff]
    %v96 = vld [vmem:[#allocation5 + $0x60] sm:$0xff]
    %v97 = vld [vmem:[#allocation5 + $0x68] sm:$0xff]
    %v98 = vld [vmem:[#allocation5 + $0x70] sm:$0xff]
    %v99 = vld [vmem:[#allocation5 + $0x78] sm:$0xff]
    %v100 = vld [vmem:[#allocation7] sm:$0x1]
    %v101 = vlaneseq
    %v102 = vshrl.u32 %v101, 7
    %v103 = vsub.s32 0, %v102
    %v104 = vrot.slane %v100, %v103
    %105 = vmatprep.subr.mxu0 0.0
    %106 = vmatpush1.msra.mxu0 %v99
    %107 = vmatprep.subr.mxu0 0.0
    %108 = vmatpush1.msra.mxu0 %v98
    %109 = vmatprep.subr.mxu0 0.0
    %110 = vmatpush1.msra.mxu0 %v97
    %111 = vmatprep.subr.mxu0 0.0
    %112 = vmatpush1.msra.mxu0 %v96
    %113 = vmatprep.subr.mxu0 0.0
    %114 = vmatpush1.msra.mxu0 %v95
    %115 = vmatprep.subr.mxu0 0.0
    %116 = vmatpush1.msra.mxu0 %v94
    %117 = vmatprep.subr.mxu0 0.0
    %118 = vmatpush1.msra.mxu0 %v93
    %119 = vmatprep.subr.mxu0 0.0
    %120 = vmatpush1.msra.mxu0 %v92
    %121 = vmatprep.subr.mxu0 0.0
    %122 = vmatpush1.msra.mxu0 %v91
    %123 = vmatprep.subr.mxu0 0.0
    %124 = vmatpush1.msra.mxu0 %v90
    %125 = vmatprep.subr.mxu0 0.0
    %126 = vmatpush1.msra.mxu0 %v89
    %127 = vmatprep.subr.mxu0 0.0
    %128 = vmatpush1.msra.mxu0 %v88
    %129 = vmatprep.subr.mxu0 0.0
    %130 = vmatpush1.msra.mxu0 %v87
    %131 = vmatprep.subr.mxu0 0.0
    %132 = vmatpush1.msra.mxu0 %v86
    %133 = vmatprep.subr.mxu0 0.0
    %134 = vmatpush1.msra.mxu0 %v85
    %135 = vmatprep.subr.mxu0 0.0
    %136 = vmatpush1.msra.mxu0 %v84
    %137 = vmatprep.subr.mxu0 0.0
    %138 = vmatpush2.msra.mxu0 0.0
    %139 = vmatprep.subr.mxu0 0.0
    %140 = vmatpush2.msra.mxu0 0.0
    %141 = vmatprep.subr.mxu0 0.0
    %142 = vmatpush2.msra.mxu0 0.0
    %143 = vmatprep.subr.mxu0 0.0
    %144 = vmatpush2.msra.mxu0 0.0
    %145 = vmatprep.subr.mxu0 0.0
    %146 = vmatpush2.msra.mxu0 0.0
    %147 = vmatprep.subr.mxu0 0.0
    %148 = vmatpush2.msra.mxu0 0.0
    %149 = vmatprep.subr.mxu0 0.0
    %150 = vmatpush2.msra.mxu0 0.0
    %151 = vmatprep.subr.mxu0 0.0
    %152 = vmatpush2.msra.mxu0 0.0
    %153 = vmatprep.subr.mxu0 0.0
    %154 = vmatpush2.msra.mxu0 0.0
    %155 = vmatprep.subr.mxu0 0.0
    %156 = vmatpush2.msra.mxu0 0.0
    %157 = vmatprep.subr.mxu0 0.0
    %158 = vmatpush2.msra.mxu0 0.0
    %159 = vmatprep.subr.mxu0 0.0
    %160 = vmatpush2.msra.mxu0 0.0
    %161 = vmatprep.subr.mxu0 0.0
    %162 = vmatpush2.msra.mxu0 0.0
    %163 = vmatprep.subr.mxu0 0.0
    %164 = vmatpush2.msra.mxu0 0.0
    %165 = vmatprep.subr.mxu0 0.0
    %166 = vmatpush2.msra.mxu0 0.0
    %167 = vmatprep.subr.mxu0 0.0
    %168 = vmatpush2.msra.mxu0 0.0
    %169 = vmatprep.mubr.f32.mxu0 0.0
    %170 = vmatmul.mubr.f32.gmra.mxu0 %v83
    %v171 = vpop.f32.mrf.mxu0
    %v172 = vadd.f32 %v104, %v171
    %v173 = vpop.f32.mrf.mxu0
    %174 = vdwg.mxu0
    %v175 = vmax.f32 %v172, 0.0
    %s176 = scalar_lea.vmem [#allocation5], 128
    %v177 = vld [vmem:[%s176] sm:$0xff]
    %v178 = vld [vmem:[%s176 + $0x8] sm:$0xff]
    %v179 = vld [vmem:[%s176 + $0x10] sm:$0xff]
    %v180 = vld [vmem:[%s176 + $0x18] sm:$0xff]
    %v181 = vld [vmem:[%s176 + $0x20] sm:$0xff]
    %v182 = vld [vmem:[%s176 + $0x28] sm:$0xff]
    %v183 = vld [vmem:[%s176 + $0x30] sm:$0xff]
    %v184 = vld [vmem:[%s176 + $0x38] sm:$0xff]
    %v185 = vld [vmem:[%s176 + $0x40] sm:$0xff]
    %v186 = vld [vmem:[%s176 + $0x48] sm:$0xff]
    %v187 = vld [vmem:[%s176 + $0x50] sm:$0xff]
    %v188 = vld [vmem:[%s176 + $0x58] sm:$0xff]
    %v189 = vld [vmem:[%s176 + $0x60] sm:$0xff]
    %v190 = vld [vmem:[%s176 + $0x68] sm:$0xff]
    %v191 = vld [vmem:[%s176 + $0x70] sm:$0xff]
    %v192 = vld [vmem:[%s176 + $0x78] sm:$0xff]
    %v193 = vld [vmem:[#allocation7 + $0x1] sm:$0x1]
    %v194 = vlaneseq
    %v195 = vshrl.u32 %v194, 7
    %v196 = vsub.s32 0, %v195
    %v197 = vrot.slane %v193, %v196
    %198 = vmatprep.subr.mxu0 0.0
    %199 = vmatpush1.msra.mxu0 %v192
    %200 = vmatprep.subr.mxu0 0.0
    %201 = vmatpush1.msra.mxu0 %v191
    %202 = vmatprep.subr.mxu0 0.0
    %203 = vmatpush1.msra.mxu0 %v190
    %204 = vmatprep.subr.mxu0 0.0
    %205 = vmatpush1.msra.mxu0 %v189
    %206 = vmatprep.subr.mxu0 0.0
    %207 = vmatpush1.msra.mxu0 %v188
    %208 = vmatprep.subr.mxu0 0.0
    %209 = vmatpush1.msra.mxu0 %v187
    %210 = vmatprep.subr.mxu0 0.0
    %211 = vmatpush1.msra.mxu0 %v186
    %212 = vmatprep.subr.mxu0 0.0
    %213 = vmatpush1.msra.mxu0 %v185
    %214 = vmatprep.subr.mxu0 0.0
    %215 = vmatpush1.msra.mxu0 %v184
    %216 = vmatprep.subr.mxu0 0.0
    %217 = vmatpush1.msra.mxu0 %v183
    %218 = vmatprep.subr.mxu0 0.0
    %219 = vmatpush1.msra.mxu0 %v182
    %220 = vmatprep.subr.mxu0 0.0
    %221 = vmatpush1.msra.mxu0 %v181
    %222 = vmatprep.subr.mxu0 0.0
    %223 = vmatpush1.msra.mxu0 %v180
    %224 = vmatprep.subr.mxu0 0.0
    %225 = vmatpush1.msra.mxu0 %v179
    %226 = vmatprep.subr.mxu0 0.0
    %227 = vmatpush1.msra.mxu0 %v178
    %228 = vmatprep.subr.mxu0 0.0
    %229 = vmatpush1.msra.mxu0 %v177
    %230 = vmatprep.subr.mxu0 0.0
    %231 = vmatpush2.msra.mxu0 0.0
    %232 = vmatprep.subr.mxu0 0.0
    %233 = vmatpush2.msra.mxu0 0.0
    %234 = vmatprep.subr.mxu0 0.0
    %235 = vmatpush2.msra.mxu0 0.0
    %236 = vmatprep.subr.mxu0 0.0
    %237 = vmatpush2.msra.mxu0 0.0
    %238 = vmatprep.subr.mxu0 0.0
    %239 = vmatpush2.msra.mxu0 0.0
    %240 = vmatprep.subr.mxu0 0.0
    %241 = vmatpush2.msra.mxu0 0.0
    %242 = vmatprep.subr.mxu0 0.0
    %243 = vmatpush2.msra.mxu0 0.0
    %244 = vmatprep.subr.mxu0 0.0
    %245 = vmatpush2.msra.mxu0 0.0
    %246 = vmatprep.subr.mxu0 0.0
    %247 = vmatpush2.msra.mxu0 0.0
    %248 = vmatprep.subr.mxu0 0.0
    %249 = vmatpush2.msra.mxu0 0.0
    %250 = vmatprep.subr.mxu0 0.0
    %251 = vmatpush2.msra.mxu0 0.0
    %252 = vmatprep.subr.mxu0 0.0
    %253 = vmatpush2.msra.mxu0 0.0
    %254 = vmatprep.subr.mxu0 0.0
    %255 = vmatpush2.msra.mxu0 0.0
    %256 = vmatprep.subr.mxu0 0.0
    %257 = vmatpush2.msra.mxu0 0.0
    %258 = vmatprep.subr.mxu0 0.0
    %259 = vmatpush2.msra.mxu0 0.0
    %260 = vmatprep.subr.mxu0 0.0
    %261 = vmatpush2.msra.mxu0 0.0
    %262 = vmatprep.mubr.f32.mxu0 0.0
    %263 = vmatmul.mubr.f32.gmra.mxu0 %v175
    %v264 = vpop.f32.mrf.mxu0
    %v265 = vadd.f32 %v197, %v264
    %v266 = vpop.f32.mrf.mxu0
    %267 = vdwg.mxu0
    %v268 = vmax.f32 %v265, 0.0
    %s269 = scalar_lea.vmem [#allocation5], 256
    %v270 = vld [vmem:[%s269] sm:$0xff]
    %v271 = vld [vmem:[%s269 + $0x8] sm:$0xff]
    %v272 = vld [vmem:[%s269 + $0x10] sm:$0xff]
    %v273 = vld [vmem:[%s269 + $0x18] sm:$0xff]
    %v274 = vld [vmem:[%s269 + $0x20] sm:$0xff]
    %v275 = vld [vmem:[%s269 + $0x28] sm:$0xff]
    %v276 = vld [vmem:[%s269 + $0x30] sm:$0xff]
    %v277 = vld [vmem:[%s269 + $0x38] sm:$0xff]
    %v278 = vld [vmem:[%s269 + $0x40] sm:$0xff]
    %v279 = vld [vmem:[%s269 + $0x48] sm:$0xff]
    %v280 = vld [vmem:[%s269 + $0x50] sm:$0xff]
    %v281 = vld [vmem:[%s269 + $0x58] sm:$0xff]
    %v282 = vld [vmem:[%s269 + $0x60] sm:$0xff]
    %v283 = vld [vmem:[%s269 + $0x68] sm:$0xff]
    %v284 = vld [vmem:[%s269 + $0x70] sm:$0xff]
    %v285 = vld [vmem:[%s269 + $0x78] sm:$0xff]
    %v286 = vld [vmem:[#allocation7 + $0x2] sm:$0x1]
    %v287 = vlaneseq
    %v288 = vshrl.u32 %v287, 7
    %v289 = vsub.s32 0, %v288
    %v290 = vrot.slane %v286, %v289
    %291 = vmatprep.subr.mxu0 0.0
    %292 = vmatpush1.msra.mxu0 %v285
    %293 = vmatprep.subr.mxu0 0.0
    %294 = vmatpush1.msra.mxu0 %v284
    %295 = vmatprep.subr.mxu0 0.0
    %296 = vmatpush1.msra.mxu0 %v283
    %297 = vmatprep.subr.mxu0 0.0
    %298 = vmatpush1.msra.mxu0 %v282
    %299 = vmatprep.subr.mxu0 0.0
    %300 = vmatpush1.msra.mxu0 %v281
    %301 = vmatprep.subr.mxu0 0.0
    %302 = vmatpush1.msra.mxu0 %v280
    %303 = vmatprep.subr.mxu0 0.0
    %304 = vmatpush1.msra.mxu0 %v279
    %305 = vmatprep.subr.mxu0 0.0
    %306 = vmatpush1.msra.mxu0 %v278
    %307 = vmatprep.subr.mxu0 0.0
    %308 = vmatpush1.msra.mxu0 %v277
    %309 = vmatprep.subr.mxu0 0.0
    %310 = vmatpush1.msra.mxu0 %v276
    %311 = vmatprep.subr.mxu0 0.0
    %312 = vmatpush1.msra.mxu0 %v275
    %313 = vmatprep.subr.mxu0 0.0
    %314 = vmatpush1.msra.mxu0 %v274
    %315 = vmatprep.subr.mxu0 0.0
    %316 = vmatpush1.msra.mxu0 %v273
    %317 = vmatprep.subr.mxu0 0.0
    %318 = vmatpush1.msra.mxu0 %v272
    %319 = vmatprep.subr.mxu0 0.0
    %320 = vmatpush1.msra.mxu0 %v271
    %321 = vmatprep.subr.mxu0 0.0
    %322 = vmatpush1.msra.mxu0 %v270
    %323 = vmatprep.subr.mxu0 0.0
    %324 = vmatpush2.msra.mxu0 0.0
    %325 = vmatprep.subr.mxu0 0.0
    %326 = vmatpush2.msra.mxu0 0.0
    %327 = vmatprep.subr.mxu0 0.0
    %328 = vmatpush2.msra.mxu0 0.0
    %329 = vmatprep.subr.mxu0 0.0
    %330 = vmatpush2.msra.mxu0 0.0
    %331 = vmatprep.subr.mxu0 0.0
    %332 = vmatpush2.msra.mxu0 0.0
    %333 = vmatprep.subr.mxu0 0.0
    %334 = vmatpush2.msra.mxu0 0.0
    %335 = vmatprep.subr.mxu0 0.0
    %336 = vmatpush2.msra.mxu0 0.0
    %337 = vmatprep.subr.mxu0 0.0
    %338 = vmatpush2.msra.mxu0 0.0
    %339 = vmatprep.subr.mxu0 0.0
    %340 = vmatpush2.msra.mxu0 0.0
    %341 = vmatprep.subr.mxu0 0.0
    %342 = vmatpush2.msra.mxu0 0.0
    %343 = vmatprep.subr.mxu0 0.0
    %344 = vmatpush2.msra.mxu0 0.0
    %345 = vmatprep.subr.mxu0 0.0
    %346 = vmatpush2.msra.mxu0 0.0
    %347 = vmatprep.subr.mxu0 0.0
    %348 = vmatpush2.msra.mxu0 0.0
    %349 = vmatprep.subr.mxu0 0.0
    %350 = vmatpush2.msra.mxu0 0.0
    %351 = vmatprep.subr.mxu0 0.0
    %352 = vmatpush2.msra.mxu0 0.0
    %353 = vmatprep.subr.mxu0 0.0
    %354 = vmatpush2.msra.mxu0 0.0
    %355 = vmatprep.mubr.f32.mxu0 0.0
    %356 = vmatmul.mubr.f32.gmra.mxu0 %v268
    %v357 = vpop.f32.mrf.mxu0
    %v358 = vadd.f32 %v290, %v357
    %v359 = vpop.f32.mrf.mxu0
    %360 = vdwg.mxu0
    %v361 = vmax.f32 %v358, 0.0
    %s362 = scalar_lea.vmem [#allocation5], 384
    %v363 = vld [vmem:[%s362] sm:$0xff]
    %v364 = vld [vmem:[%s362 + $0x8] sm:$0xff]
    %v365 = vld [vmem:[%s362 + $0x10] sm:$0xff]
    %v366 = vld [vmem:[%s362 + $0x18] sm:$0xff]
    %v367 = vld [vmem:[%s362 + $0x20] sm:$0xff]
    %v368 = vld [vmem:[%s362 + $0x28] sm:$0xff]
    %v369 = vld [vmem:[%s362 + $0x30] sm:$0xff]
    %v370 = vld [vmem:[%s362 + $0x38] sm:$0xff]
    %v371 = vld [vmem:[%s362 + $0x40] sm:$0xff]
    %v372 = vld [vmem:[%s362 + $0x48] sm:$0xff]
    %v373 = vld [vmem:[%s362 + $0x50] sm:$0xff]
    %v374 = vld [vmem:[%s362 + $0x58] sm:$0xff]
    %v375 = vld [vmem:[%s362 + $0x60] sm:$0xff]
    %v376 = vld [vmem:[%s362 + $0x68] sm:$0xff]
    %v377 = vld [vmem:[%s362 + $0x70] sm:$0xff]
    %v378 = vld [vmem:[%s362 + $0x78] sm:$0xff]
    %v379 = vld [vmem:[#allocation7 + $0x3] sm:$0x1]
    %v380 = vlaneseq
    %v381 = vshrl.u32 %v380, 7
    %v382 = vsub.s32 0, %v381
    %v383 = vrot.slane %v379, %v382
    %384 = vmatprep.subr.mxu0 0.0
    %385 = vmatpush1.msra.mxu0 %v378
    %386 = vmatprep.subr.mxu0 0.0
    %387 = vmatpush1.msra.mxu0 %v377
    %388 = vmatprep.subr.mxu0 0.0
    %389 = vmatpush1.msra.mxu0 %v376
    %390 = vmatprep.subr.mxu0 0.0
    %391 = vmatpush1.msra.mxu0 %v375
    %392 = vmatprep.subr.mxu0 0.0
    %393 = vmatpush1.msra.mxu0 %v374
    %394 = vmatprep.subr.mxu0 0.0
    %395 = vmatpush1.msra.mxu0 %v373
    %396 = vmatprep.subr.mxu0 0.0
    %397 = vmatpush1.msra.mxu0 %v372
    %398 = vmatprep.subr.mxu0 0.0
    %399 = vmatpush1.msra.mxu0 %v371
    %400 = vmatprep.subr.mxu0 0.0
    %401 = vmatpush1.msra.mxu0 %v370
    %402 = vmatprep.subr.mxu0 0.0
    %403 = vmatpush1.msra.mxu0 %v369
    %404 = vmatprep.subr.mxu0 0.0
    %405 = vmatpush1.msra.mxu0 %v368
    %406 = vmatprep.subr.mxu0 0.0
    %407 = vmatpush1.msra.mxu0 %v367
    %408 = vmatprep.subr.mxu0 0.0
    %409 = vmatpush1.msra.mxu0 %v366
    %410 = vmatprep.subr.mxu0 0.0
    %411 = vmatpush1.msra.mxu0 %v365
    %412 = vmatprep.subr.mxu0 0.0
    %413 = vmatpush1.msra.mxu0 %v364
    %414 = vmatprep.subr.mxu0 0.0
    %415 = vmatpush1.msra.mxu0 %v363
    %416 = vmatprep.subr.mxu0 0.0
    %417 = vmatpush2.msra.mxu0 0.0
    %418 = vmatprep.subr.mxu0 0.0
    %419 = vmatpush2.msra.mxu0 0.0
    %420 = vmatprep.subr.mxu0 0.0
    %421 = vmatpush2.msra.mxu0 0.0
    %422 = vmatprep.subr.mxu0 0.0
    %423 = vmatpush2.msra.mxu0 0.0
    %424 = vmatprep.subr.mxu0 0.0
    %425 = vmatpush2.msra.mxu0 0.0
    %426 = vmatprep.subr.mxu0 0.0
    %427 = vmatpush2.msra.mxu0 0.0
    %428 = vmatprep.subr.mxu0 0.0
    %429 = vmatpush2.msra.mxu0 0.0
    %430 = vmatprep.subr.mxu0 0.0
    %431 = vmatpush2.msra.mxu0 0.0
    %432 = vmatprep.subr.mxu0 0.0
    %433 = vmatpush2.msra.mxu0 0.0
    %434 = vmatprep.subr.mxu0 0.0
    %435 = vmatpush2.msra.mxu0 0.0
    %436 = vmatprep.subr.mxu0 0.0
    %437 = vmatpush2.msra.mxu0 0.0
    %438 = vmatprep.subr.mxu0 0.0
    %439 = vmatpush2.msra.mxu0 0.0
    %440 = vmatprep.subr.mxu0 0.0
    %441 = vmatpush2.msra.mxu0 0.0
    %442 = vmatprep.subr.mxu0 0.0
    %443 = vmatpush2.msra.mxu0 0.0
    %444 = vmatprep.subr.mxu0 0.0
    %445 = vmatpush2.msra.mxu0 0.0
    %446 = vmatprep.subr.mxu0 0.0
    %447 = vmatpush2.msra.mxu0 0.0
    %448 = vmatprep.mubr.f32.mxu0 0.0
    %449 = vmatmul.mubr.f32.gmra.mxu0 %v361
    %v450 = vpop.f32.mrf.mxu0
    %v451 = vadd.f32 %v383, %v450
    %v452 = vpop.f32.mrf.mxu0
    %453 = vdwg.mxu0
    %v454 = vmax.f32 %v451, 0.0
    %s455 = scalar_lea.vmem [#allocation5], 512
    %v456 = vld [vmem:[%s455] sm:$0xff]
    %v457 = vld [vmem:[%s455 + $0x8] sm:$0xff]
    %v458 = vld [vmem:[%s455 + $0x10] sm:$0xff]
    %v459 = vld [vmem:[%s455 + $0x18] sm:$0xff]
    %v460 = vld [vmem:[%s455 + $0x20] sm:$0xff]
    %v461 = vld [vmem:[%s455 + $0x28] sm:$0xff]
    %v462 = vld [vmem:[%s455 + $0x30] sm:$0xff]
    %v463 = vld [vmem:[%s455 + $0x38] sm:$0xff]
    %v464 = vld [vmem:[%s455 + $0x40] sm:$0xff]
    %v465 = vld [vmem:[%s455 + $0x48] sm:$0xff]
    %v466 = vld [vmem:[%s455 + $0x50] sm:$0xff]
    %v467 = vld [vmem:[%s455 + $0x58] sm:$0xff]
    %v468 = vld [vmem:[%s455 + $0x60] sm:$0xff]
    %v469 = vld [vmem:[%s455 + $0x68] sm:$0xff]
    %v470 = vld [vmem:[%s455 + $0x70] sm:$0xff]
    %v471 = vld [vmem:[%s455 + $0x78] sm:$0xff]
    %v472 = vld [vmem:[#allocation7 + $0x4] sm:$0x1]
    %v473 = vlaneseq
    %v474 = vshrl.u32 %v473, 7
    %v475 = vsub.s32 0, %v474
    %v476 = vrot.slane %v472, %v475
    %477 = vmatprep.subr.mxu0 0.0
    %478 = vmatpush1.msra.mxu0 %v471
    %479 = vmatprep.subr.mxu0 0.0
    %480 = vmatpush1.msra.mxu0 %v470
    %481 = vmatprep.subr.mxu0 0.0
    %482 = vmatpush1.msra.mxu0 %v469
    %483 = vmatprep.subr.mxu0 0.0
    %484 = vmatpush1.msra.mxu0 %v468
    %485 = vmatprep.subr.mxu0 0.0
    %486 = vmatpush1.msra.mxu0 %v467
    %487 = vmatprep.subr.mxu0 0.0
    %488 = vmatpush1.msra.mxu0 %v466
    %489 = vmatprep.subr.mxu0 0.0
    %490 = vmatpush1.msra.mxu0 %v465
    %491 = vmatprep.subr.mxu0 0.0
    %492 = vmatpush1.msra.mxu0 %v464
    %493 = vmatprep.subr.mxu0 0.0
    %494 = vmatpush1.msra.mxu0 %v463
    %495 = vmatprep.subr.mxu0 0.0
    %496 = vmatpush1.msra.mxu0 %v462
    %497 = vmatprep.subr.mxu0 0.0
    %498 = vmatpush1.msra.mxu0 %v461
    %499 = vmatprep.subr.mxu0 0.0
    %500 = vmatpush1.msra.mxu0 %v460
    %501 = vmatprep.subr.mxu0 0.0
    %502 = vmatpush1.msra.mxu0 %v459
    %503 = vmatprep.subr.mxu0 0.0
    %504 = vmatpush1.msra.mxu0 %v458
    %505 = vmatprep.subr.mxu0 0.0
    %506 = vmatpush1.msra.mxu0 %v457
    %507 = vmatprep.subr.mxu0 0.0
    %508 = vmatpush1.msra.mxu0 %v456
    %509 = vmatprep.subr.mxu0 0.0
    %510 = vmatpush2.msra.mxu0 0.0
    %511 = vmatprep.subr.mxu0 0.0
    %512 = vmatpush2.msra.mxu0 0.0
    %513 = vmatprep.subr.mxu0 0.0
    %514 = vmatpush2.msra.mxu0 0.0
    %515 = vmatprep.subr.mxu0 0.0
    %516 = vmatpush2.msra.mxu0 0.0
    %517 = vmatprep.subr.mxu0 0.0
    %518 = vmatpush2.msra.mxu0 0.0
    %519 = vmatprep.subr.mxu0 0.0
    %520 = vmatpush2.msra.mxu0 0.0
    %521 = vmatprep.subr.mxu0 0.0
    %522 = vmatpush2.msra.mxu0 0.0
    %523 = vmatprep.subr.mxu0 0.0
    %524 = vmatpush2.msra.mxu0 0.0
    %525 = vmatprep.subr.mxu0 0.0
    %526 = vmatpush2.msra.mxu0 0.0
    %527 = vmatprep.subr.mxu0 0.0
    %528 = vmatpush2.msra.mxu0 0.0
    %529 = vmatprep.subr.mxu0 0.0
    %530 = vmatpush2.msra.mxu0 0.0
    %531 = vmatprep.subr.mxu0 0.0
    %532 = vmatpush2.msra.mxu0 0.0
    %533 = vmatprep.subr.mxu0 0.0
    %534 = vmatpush2.msra.mxu0 0.0
    %535 = vmatprep.subr.mxu0 0.0
    %536 = vmatpush2.msra.mxu0 0.0
    %537 = vmatprep.subr.mxu0 0.0
    %538 = vmatpush2.msra.mxu0 0.0
    %539 = vmatprep.subr.mxu0 0.0
    %540 = vmatpush2.msra.mxu0 0.0
    %541 = vmatprep.mubr.f32.mxu0 0.0
    %542 = vmatmul.mubr.f32.gmra.mxu0 %v454
    %v543 = vpop.f32.mrf.mxu0
    %v544 = vadd.f32 %v476, %v543
    %v545 = vpop.f32.mrf.mxu0
    %546 = vdwg.mxu0
    %v547 = vmax.f32 %v544, 0.0
    %s548 = scalar_lea.vmem [#allocation5], 640
    %v549 = vld [vmem:[%s548] sm:$0xff]
    %v550 = vld [vmem:[%s548 + $0x8] sm:$0xff]
    %v551 = vld [vmem:[%s548 + $0x10] sm:$0xff]
    %v552 = vld [vmem:[%s548 + $0x18] sm:$0xff]
    %v553 = vld [vmem:[%s548 + $0x20] sm:$0xff]
    %v554 = vld [vmem:[%s548 + $0x28] sm:$0xff]
    %v555 = vld [vmem:[%s548 + $0x30] sm:$0xff]
    %v556 = vld [vmem:[%s548 + $0x38] sm:$0xff]
    %v557 = vld [vmem:[%s548 + $0x40] sm:$0xff]
    %v558 = vld [vmem:[%s548 + $0x48] sm:$0xff]
    %v559 = vld [vmem:[%s548 + $0x50] sm:$0xff]
    %v560 = vld [vmem:[%s548 + $0x58] sm:$0xff]
    %v561 = vld [vmem:[%s548 + $0x60] sm:$0xff]
    %v562 = vld [vmem:[%s548 + $0x68] sm:$0xff]
    %v563 = vld [vmem:[%s548 + $0x70] sm:$0xff]
    %v564 = vld [vmem:[%s548 + $0x78] sm:$0xff]
    %v565 = vld [vmem:[#allocation7 + $0x5] sm:$0x1]
    %v566 = vlaneseq
    %v567 = vshrl.u32 %v566, 7
    %v568 = vsub.s32 0, %v567
    %v569 = vrot.slane %v565, %v568
    %570 = vmatprep.subr.mxu0 0.0
    %571 = vmatpush1.msra.mxu0 %v564
    %572 = vmatprep.subr.mxu0 0.0
    %573 = vmatpush1.msra.mxu0 %v563
    %574 = vmatprep.subr.mxu0 0.0
    %575 = vmatpush1.msra.mxu0 %v562
    %576 = vmatprep.subr.mxu0 0.0
    %577 = vmatpush1.msra.mxu0 %v561
    %578 = vmatprep.subr.mxu0 0.0
    %579 = vmatpush1.msra.mxu0 %v560
    %580 = vmatprep.subr.mxu0 0.0
    %581 = vmatpush1.msra.mxu0 %v559
    %582 = vmatprep.subr.mxu0 0.0
    %583 = vmatpush1.msra.mxu0 %v558
    %584 = vmatprep.subr.mxu0 0.0
    %585 = vmatpush1.msra.mxu0 %v557
    %586 = vmatprep.subr.mxu0 0.0
    %587 = vmatpush1.msra.mxu0 %v556
    %588 = vmatprep.subr.mxu0 0.0
    %589 = vmatpush1.msra.mxu0 %v555
    %590 = vmatprep.subr.mxu0 0.0
    %591 = vmatpush1.msra.mxu0 %v554
    %592 = vmatprep.subr.mxu0 0.0
    %593 = vmatpush1.msra.mxu0 %v553
    %594 = vmatprep.subr.mxu0 0.0
    %595 = vmatpush1.msra.mxu0 %v552
    %596 = vmatprep.subr.mxu0 0.0
    %597 = vmatpush1.msra.mxu0 %v551
    %598 = vmatprep.subr.mxu0 0.0
    %599 = vmatpush1.msra.mxu0 %v550
    %600 = vmatprep.subr.mxu0 0.0
    %601 = vmatpush1.msra.mxu0 %v549
    %602 = vmatprep.subr.mxu0 0.0
    %603 = vmatpush2.msra.mxu0 0.0
    %604 = vmatprep.subr.mxu0 0.0
    %605 = vmatpush2.msra.mxu0 0.0
    %606 = vmatprep.subr.mxu0 0.0
    %607 = vmatpush2.msra.mxu0 0.0
    %608 = vmatprep.subr.mxu0 0.0
    %609 = vmatpush2.msra.mxu0 0.0
    %610 = vmatprep.subr.mxu0 0.0
    %611 = vmatpush2.msra.mxu0 0.0
    %612 = vmatprep.subr.mxu0 0.0
    %613 = vmatpush2.msra.mxu0 0.0
    %614 = vmatprep.subr.mxu0 0.0
    %615 = vmatpush2.msra.mxu0 0.0
    %616 = vmatprep.subr.mxu0 0.0
    %617 = vmatpush2.msra.mxu0 0.0
    %618 = vmatprep.subr.mxu0 0.0
    %619 = vmatpush2.msra.mxu0 0.0
    %620 = vmatprep.subr.mxu0 0.0
    %621 = vmatpush2.msra.mxu0 0.0
    %622 = vmatprep.subr.mxu0 0.0
    %623 = vmatpush2.msra.mxu0 0.0
    %624 = vmatprep.subr.mxu0 0.0
    %625 = vmatpush2.msra.mxu0 0.0
    %626 = vmatprep.subr.mxu0 0.0
    %627 = vmatpush2.msra.mxu0 0.0
    %628 = vmatprep.subr.mxu0 0.0
    %629 = vmatpush2.msra.mxu0 0.0
    %630 = vmatprep.subr.mxu0 0.0
    %631 = vmatpush2.msra.mxu0 0.0
    %632 = vmatprep.subr.mxu0 0.0
    %633 = vmatpush2.msra.mxu0 0.0
    %634 = vmatprep.mubr.f32.mxu0 0.0
    %635 = vmatmul.mubr.f32.gmra.mxu0 %v547
    %v636 = vpop.f32.mrf.mxu0
    %v637 = vadd.f32 %v569, %v636
    %v638 = vpop.f32.mrf.mxu0
    %639 = vdwg.mxu0
    %v640 = vmax.f32 %v637, 0.0
    %s641 = scalar_lea.vmem [#allocation5], 768
    %v642 = vld [vmem:[%s641] sm:$0xff]
    %v643 = vld [vmem:[%s641 + $0x8] sm:$0xff]
    %v644 = vld [vmem:[%s641 + $0x10] sm:$0xff]
    %v645 = vld [vmem:[%s641 + $0x18] sm:$0xff]
    %v646 = vld [vmem:[%s641 + $0x20] sm:$0xff]
    %v647 = vld [vmem:[%s641 + $0x28] sm:$0xff]
    %v648 = vld [vmem:[%s641 + $0x30] sm:$0xff]
    %v649 = vld [vmem:[%s641 + $0x38] sm:$0xff]
    %v650 = vld [vmem:[%s641 + $0x40] sm:$0xff]
    %v651 = vld [vmem:[%s641 + $0x48] sm:$0xff]
    %v652 = vld [vmem:[%s641 + $0x50] sm:$0xff]
    %v653 = vld [vmem:[%s641 + $0x58] sm:$0xff]
    %v654 = vld [vmem:[%s641 + $0x60] sm:$0xff]
    %v655 = vld [vmem:[%s641 + $0x68] sm:$0xff]
    %v656 = vld [vmem:[%s641 + $0x70] sm:$0xff]
    %v657 = vld [vmem:[%s641 + $0x78] sm:$0xff]
    %v658 = vld [vmem:[#allocation7 + $0x6] sm:$0x1]
    %v659 = vlaneseq
    %v660 = vshrl.u32 %v659, 7
    %v661 = vsub.s32 0, %v660
    %v662 = vrot.slane %v658, %v661
    %663 = vmatprep.subr.mxu0 0.0
    %664 = vmatpush1.msra.mxu0 %v657
    %665 = vmatprep.subr.mxu0 0.0
    %666 = vmatpush1.msra.mxu0 %v656
    %667 = vmatprep.subr.mxu0 0.0
    %668 = vmatpush1.msra.mxu0 %v655
    %669 = vmatprep.subr.mxu0 0.0
    %670 = vmatpush1.msra.mxu0 %v654
    %671 = vmatprep.subr.mxu0 0.0
    %672 = vmatpush1.msra.mxu0 %v653
    %673 = vmatprep.subr.mxu0 0.0
    %674 = vmatpush1.msra.mxu0 %v652
    %675 = vmatprep.subr.mxu0 0.0
    %676 = vmatpush1.msra.mxu0 %v651
    %677 = vmatprep.subr.mxu0 0.0
    %678 = vmatpush1.msra.mxu0 %v650
    %679 = vmatprep.subr.mxu0 0.0
    %680 = vmatpush1.msra.mxu0 %v649
    %681 = vmatprep.subr.mxu0 0.0
    %682 = vmatpush1.msra.mxu0 %v648
    %683 = vmatprep.subr.mxu0 0.0
    %684 = vmatpush1.msra.mxu0 %v647
    %685 = vmatprep.subr.mxu0 0.0
    %686 = vmatpush1.msra.mxu0 %v646
    %687 = vmatprep.subr.mxu0 0.0
    %688 = vmatpush1.msra.mxu0 %v645
    %689 = vmatprep.subr.mxu0 0.0
    %690 = vmatpush1.msra.mxu0 %v644
    %691 = vmatprep.subr.mxu0 0.0
    %692 = vmatpush1.msra.mxu0 %v643
    %693 = vmatprep.subr.mxu0 0.0
    %694 = vmatpush1.msra.mxu0 %v642
    %695 = vmatprep.subr.mxu0 0.0
    %696 = vmatpush2.msra.mxu0 0.0
    %697 = vmatprep.subr.mxu0 0.0
    %698 = vmatpush2.msra.mxu0 0.0
    %699 = vmatprep.subr.mxu0 0.0
    %700 = vmatpush2.msra.mxu0 0.0
    %701 = vmatprep.subr.mxu0 0.0
    %702 = vmatpush2.msra.mxu0 0.0
    %703 = vmatprep.subr.mxu0 0.0
    %704 = vmatpush2.msra.mxu0 0.0
    %705 = vmatprep.subr.mxu0 0.0
    %706 = vmatpush2.msra.mxu0 0.0
    %707 = vmatprep.subr.mxu0 0.0
    %708 = vmatpush2.msra.mxu0 0.0
    %709 = vmatprep.subr.mxu0 0.0
    %710 = vmatpush2.msra.mxu0 0.0
    %711 = vmatprep.subr.mxu0 0.0
    %712 = vmatpush2.msra.mxu0 0.0
    %713 = vmatprep.subr.mxu0 0.0
    %714 = vmatpush2.msra.mxu0 0.0
    %715 = vmatprep.subr.mxu0 0.0
    %716 = vmatpush2.msra.mxu0 0.0
    %717 = vmatprep.subr.mxu0 0.0
    %718 = vmatpush2.msra.mxu0 0.0
    %719 = vmatprep.subr.mxu0 0.0
    %720 = vmatpush2.msra.mxu0 0.0
    %721 = vmatprep.subr.mxu0 0.0
    %722 = vmatpush2.msra.mxu0 0.0
    %723 = vmatprep.subr.mxu0 0.0
    %724 = vmatpush2.msra.mxu0 0.0
    %725 = vmatprep.subr.mxu0 0.0
    %726 = vmatpush2.msra.mxu0 0.0
    %727 = vmatprep.mubr.f32.mxu0 0.0
    %728 = vmatmul.mubr.f32.gmra.mxu0 %v640
    %v729 = vpop.f32.mrf.mxu0
    %v730 = vadd.f32 %v662, %v729
    %v731 = vpop.f32.mrf.mxu0
    %732 = vdwg.mxu0
    %v733 = vmax.f32 %v730, 0.0
    %s734 = scalar_lea.vmem [#allocation5], 896
    %v735 = vld [vmem:[%s734] sm:$0xff]
    %v736 = vld [vmem:[%s734 + $0x8] sm:$0xff]
    %v737 = vld [vmem:[%s734 + $0x10] sm:$0xff]
    %v738 = vld [vmem:[%s734 + $0x18] sm:$0xff]
    %v739 = vld [vmem:[%s734 + $0x20] sm:$0xff]
    %v740 = vld [vmem:[%s734 + $0x28] sm:$0xff]
    %v741 = vld [vmem:[%s734 + $0x30] sm:$0xff]
    %v742 = vld [vmem:[%s734 + $0x38] sm:$0xff]
    %v743 = vld [vmem:[%s734 + $0x40] sm:$0xff]
    %v744 = vld [vmem:[%s734 + $0x48] sm:$0xff]
    %v745 = vld [vmem:[%s734 + $0x50] sm:$0xff]
    %v746 = vld [vmem:[%s734 + $0x58] sm:$0xff]
    %v747 = vld [vmem:[%s734 + $0x60] sm:$0xff]
    %v748 = vld [vmem:[%s734 + $0x68] sm:$0xff]
    %v749 = vld [vmem:[%s734 + $0x70] sm:$0xff]
    %v750 = vld [vmem:[%s734 + $0x78] sm:$0xff]
    %v751 = vld [vmem:[#allocation7 + $0x7] sm:$0x1]
    %v752 = vlaneseq
    %v753 = vshrl.u32 %v752, 7
    %v754 = vsub.s32 0, %v753
    %v755 = vrot.slane %v751, %v754
    %756 = vmatprep.subr.mxu0 0.0
    %757 = vmatpush1.msra.mxu0 %v750
    %758 = vmatprep.subr.mxu0 0.0
    %759 = vmatpush1.msra.mxu0 %v749
    %760 = vmatprep.subr.mxu0 0.0
    %761 = vmatpush1.msra.mxu0 %v748
    %762 = vmatprep.subr.mxu0 0.0
    %763 = vmatpush1.msra.mxu0 %v747
    %764 = vmatprep.subr.mxu0 0.0
    %765 = vmatpush1.msra.mxu0 %v746
    %766 = vmatprep.subr.mxu0 0.0
    %767 = vmatpush1.msra.mxu0 %v745
    %768 = vmatprep.subr.mxu0 0.0
    %769 = vmatpush1.msra.mxu0 %v744
    %770 = vmatprep.subr.mxu0 0.0
    %771 = vmatpush1.msra.mxu0 %v743
    %772 = vmatprep.subr.mxu0 0.0
    %773 = vmatpush1.msra.mxu0 %v742
    %774 = vmatprep.subr.mxu0 0.0
    %775 = vmatpush1.msra.mxu0 %v741
    %776 = vmatprep.subr.mxu0 0.0
    %777 = vmatpush1.msra.mxu0 %v740
    %778 = vmatprep.subr.mxu0 0.0
    %779 = vmatpush1.msra.mxu0 %v739
    %780 = vmatprep.subr.mxu0 0.0
    %781 = vmatpush1.msra.mxu0 %v738
    %782 = vmatprep.subr.mxu0 0.0
    %783 = vmatpush1.msra.mxu0 %v737
    %784 = vmatprep.subr.mxu0 0.0
    %785 = vmatpush1.msra.mxu0 %v736
    %786 = vmatprep.subr.mxu0 0.0
    %787 = vmatpush1.msra.mxu0 %v735
    %788 = vmatprep.subr.mxu0 0.0
    %789 = vmatpush2.msra.mxu0 0.0
    %790 = vmatprep.subr.mxu0 0.0
    %791 = vmatpush2.msra.mxu0 0.0
    %792 = vmatprep.subr.mxu0 0.0
    %793 = vmatpush2.msra.mxu0 0.0
    %794 = vmatprep.subr.mxu0 0.0
    %795 = vmatpush2.msra.mxu0 0.0
    %796 = vmatprep.subr.mxu0 0.0
    %797 = vmatpush2.msra.mxu0 0.0
    %798 = vmatprep.subr.mxu0 0.0
    %799 = vmatpush2.msra.mxu0 0.0
    %800 = vmatprep.subr.mxu0 0.0
    %801 = vmatpush2.msra.mxu0 0.0
    %802 = vmatprep.subr.mxu0 0.0
    %803 = vmatpush2.msra.mxu0 0.0
    %804 = vmatprep.subr.mxu0 0.0
    %805 = vmatpush2.msra.mxu0 0.0
    %806 = vmatprep.subr.mxu0 0.0
    %807 = vmatpush2.msra.mxu0 0.0
    %808 = vmatprep.subr.mxu0 0.0
    %809 = vmatpush2.msra.mxu0 0.0
    %810 = vmatprep.subr.mxu0 0.0
    %811 = vmatpush2.msra.mxu0 0.0
    %812 = vmatprep.subr.mxu0 0.0
    %813 = vmatpush2.msra.mxu0 0.0
    %814 = vmatprep.subr.mxu0 0.0
    %815 = vmatpush2.msra.mxu0 0.0
    %816 = vmatprep.subr.mxu0 0.0
    %817 = vmatpush2.msra.mxu0 0.0
    %818 = vmatprep.subr.mxu0 0.0
    %819 = vmatpush2.msra.mxu0 0.0
    %820 = vmatprep.mubr.f32.mxu0 0.0
    %821 = vmatmul.mubr.f32.gmra.mxu0 %v733
    %v822 = vpop.f32.mrf.mxu0
    %v823 = vadd.f32 %v755, %v822
    %v824 = vpop.f32.mrf.mxu0
    %825 = vdwg.mxu0
    %v826 = vmax.f32 %v823, 0.0
    %v827 = vld [vmem:[#allocation8] sm:$0xff]
    %v828 = vld [vmem:[#allocation8 + $0x8] sm:$0xff]
    %v829 = vld [vmem:[#allocation8 + $0x10] sm:$0xff]
    %v830 = vld [vmem:[#allocation8 + $0x18] sm:$0xff]
    %v831 = vld [vmem:[#allocation8 + $0x20] sm:$0xff]
    %v832 = vld [vmem:[#allocation8 + $0x28] sm:$0xff]
    %v833 = vld [vmem:[#allocation8 + $0x30] sm:$0xff]
    %v834 = vld [vmem:[#allocation8 + $0x38] sm:$0xff]
    %v835 = vld [vmem:[#allocation8 + $0x40] sm:$0xff]
    %v836 = vld [vmem:[#allocation8 + $0x48] sm:$0xff]
    %v837 = vld [vmem:[#allocation8 + $0x50] sm:$0xff]
    %v838 = vld [vmem:[#allocation8 + $0x58] sm:$0xff]
    %v839 = vld [vmem:[#allocation8 + $0x60] sm:$0xff]
    %v840 = vld [vmem:[#allocation8 + $0x68] sm:$0xff]
    %v841 = vld [vmem:[#allocation8 + $0x70] sm:$0xff]
    %v842 = vld [vmem:[#allocation8 + $0x78] sm:$0xff]
    %v843 = vld [vmem:[#allocation8 + $0x80] sm:$0xff]
    %v844 = vld [vmem:[#allocation8 + $0x88] sm:$0xff]
    %v845 = vld [vmem:[#allocation8 + $0x90] sm:$0xff]
    %v846 = vld [vmem:[#allocation8 + $0x98] sm:$0xff]
    %v847 = vld [vmem:[#allocation8 + $0xa0] sm:$0xff]
    %v848 = vld [vmem:[#allocation8 + $0xa8] sm:$0xff]
    %v849 = vld [vmem:[#allocation8 + $0xb0] sm:$0xff]
    %v850 = vld [vmem:[#allocation8 + $0xb8] sm:$0xff]
    %v851 = vld [vmem:[#allocation8 + $0xc0] sm:$0xff]
    %v852 = vld [vmem:[#allocation8 + $0xc8] sm:$0xff]
    %v853 = vld [vmem:[#allocation8 + $0xd0] sm:$0xff]
    %v854 = vld [vmem:[#allocation8 + $0xd8] sm:$0xff]
    %v855 = vld [vmem:[#allocation8 + $0xe0] sm:$0xff]
    %v856 = vld [vmem:[#allocation8 + $0xe8] sm:$0xff]
    %v857 = vld [vmem:[#allocation8 + $0xf0] sm:$0xff]
    %v858 = vld [vmem:[#allocation8 + $0xf8] sm:$0xff]
    %v859 = vld [vmem:[#allocation8 + $0x100] sm:$0xff]
    %v860 = vld [vmem:[#allocation8 + $0x108] sm:$0xff]
    %v861 = vld [vmem:[#allocation8 + $0x110] sm:$0xff]
    %v862 = vld [vmem:[#allocation8 + $0x118] sm:$0xff]
    %v863 = vld [vmem:[#allocation8 + $0x120] sm:$0xff]
    %v864 = vld [vmem:[#allocation8 + $0x128] sm:$0xff]
    %v865 = vld [vmem:[#allocation8 + $0x130] sm:$0xff]
    %v866 = vld [vmem:[#allocation8 + $0x138] sm:$0xff]
    %v867 = vld [vmem:[#allocation8 + $0x140] sm:$0xff]
    %v868 = vld [vmem:[#allocation8 + $0x148] sm:$0xff]
    %v869 = vld [vmem:[#allocation8 + $0x150] sm:$0xff]
    %v870 = vld [vmem:[#allocation8 + $0x158] sm:$0xff]
    %v871 = vld [vmem:[#allocation8 + $0x160] sm:$0xff]
    %v872 = vld [vmem:[#allocation8 + $0x168] sm:$0xff]
    %v873 = vld [vmem:[#allocation8 + $0x170] sm:$0xff]
    %v874 = vld [vmem:[#allocation8 + $0x178] sm:$0xff]
    %v875 = vld [vmem:[#allocation8 + $0x180] sm:$0xff]
    %v876 = vld [vmem:[#allocation8 + $0x188] sm:$0xff]
    %v877 = vld [vmem:[#allocation8 + $0x190] sm:$0xff]
    %v878 = vld [vmem:[#allocation8 + $0x198] sm:$0xff]
    %v879 = vld [vmem:[#allocation8 + $0x1a0] sm:$0xff]
    %v880 = vld [vmem:[#allocation8 + $0x1a8] sm:$0xff]
    %v881 = vld [vmem:[#allocation8 + $0x1b0] sm:$0xff]
    %v882 = vld [vmem:[#allocation8 + $0x1b8] sm:$0xff]
    %v883 = vld [vmem:[#allocation8 + $0x1c0] sm:$0xff]
    %v884 = vld [vmem:[#allocation8 + $0x1c8] sm:$0xff]
    %v885 = vld [vmem:[#allocation8 + $0x1d0] sm:$0xff]
    %v886 = vld [vmem:[#allocation8 + $0x1d8] sm:$0xff]
    %v887 = vld [vmem:[#allocation8 + $0x1e0] sm:$0xff]
    %v888 = vld [vmem:[#allocation8 + $0x1e8] sm:$0xff]
    %v889 = vld [vmem:[#allocation8 + $0x1f0] sm:$0xff]
    %v890 = vld [vmem:[#allocation8 + $0x1f8] sm:$0xff]
    %v891 = vld [vmem:[#allocation8 + $0x200] sm:$0xff]
    %v892 = vld [vmem:[#allocation8 + $0x208] sm:$0xff]
    %v893 = vld [vmem:[#allocation8 + $0x210] sm:$0xff]
    %v894 = vld [vmem:[#allocation8 + $0x218] sm:$0xff]
    %v895 = vld [vmem:[#allocation8 + $0x220] sm:$0xff]
    %v896 = vld [vmem:[#allocation8 + $0x228] sm:$0xff]
    %v897 = vld [vmem:[#allocation8 + $0x230] sm:$0xff]
    %v898 = vld [vmem:[#allocation8 + $0x238] sm:$0xff]
    %v899 = vld [vmem:[#allocation8 + $0x240] sm:$0xff]
    %v900 = vld [vmem:[#allocation8 + $0x248] sm:$0xff]
    %v901 = vld [vmem:[#allocation8 + $0x250] sm:$0xff]
    %v902 = vld [vmem:[#allocation8 + $0x258] sm:$0xff]
    %v903 = vld [vmem:[#allocation8 + $0x260] sm:$0xff]
    %v904 = vld [vmem:[#allocation8 + $0x268] sm:$0xff]
    %v905 = vld [vmem:[#allocation8 + $0x270] sm:$0xff]
    %v906 = vld [vmem:[#allocation8 + $0x278] sm:$0xff]
    %v907 = vld [vmem:[#allocation8 + $0x280] sm:$0xff]
    %v908 = vld [vmem:[#allocation8 + $0x288] sm:$0xff]
    %v909 = vld [vmem:[#allocation8 + $0x290] sm:$0xff]
    %v910 = vld [vmem:[#allocation8 + $0x298] sm:$0xff]
    %v911 = vld [vmem:[#allocation8 + $0x2a0] sm:$0xff]
    %v912 = vld [vmem:[#allocation8 + $0x2a8] sm:$0xff]
    %v913 = vld [vmem:[#allocation8 + $0x2b0] sm:$0xff]
    %v914 = vld [vmem:[#allocation8 + $0x2b8] sm:$0xff]
    %v915 = vld [vmem:[#allocation8 + $0x2c0] sm:$0xff]
    %v916 = vld [vmem:[#allocation8 + $0x2c8] sm:$0xff]
    %v917 = vld [vmem:[#allocation8 + $0x2d0] sm:$0xff]
    %v918 = vld [vmem:[#allocation8 + $0x2d8] sm:$0xff]
    %v919 = vld [vmem:[#allocation8 + $0x2e0] sm:$0xff]
    %v920 = vld [vmem:[#allocation8 + $0x2e8] sm:$0xff]
    %v921 = vld [vmem:[#allocation8 + $0x2f0] sm:$0xff]
    %v922 = vld [vmem:[#allocation8 + $0x2f8] sm:$0xff]
    %v923 = vld [vmem:[#allocation8 + $0x300] sm:$0xff]
    %v924 = vld [vmem:[#allocation8 + $0x308] sm:$0xff]
    %v925 = vld [vmem:[#allocation8 + $0x310] sm:$0xff]
    %v926 = vld [vmem:[#allocation8 + $0x318] sm:$0xff]
    %v927 = vld [vmem:[#allocation8 + $0x320] sm:$0xff]
    %v928 = vld [vmem:[#allocation8 + $0x328] sm:$0xff]
    %v929 = vld [vmem:[#allocation8 + $0x330] sm:$0xff]
    %v930 = vld [vmem:[#allocation8 + $0x338] sm:$0xff]
    %v931 = vld [vmem:[#allocation8 + $0x340] sm:$0xff]
    %v932 = vld [vmem:[#allocation8 + $0x348] sm:$0xff]
    %v933 = vld [vmem:[#allocation8 + $0x350] sm:$0xff]
    %v934 = vld [vmem:[#allocation8 + $0x358] sm:$0xff]
    %v935 = vld [vmem:[#allocation8 + $0x360] sm:$0xff]
    %v936 = vld [vmem:[#allocation8 + $0x368] sm:$0xff]
    %v937 = vld [vmem:[#allocation8 + $0x370] sm:$0xff]
    %v938 = vld [vmem:[#allocation8 + $0x378] sm:$0xff]
    %v939 = vld [vmem:[#allocation8 + $0x380] sm:$0xff]
    %v940 = vld [vmem:[#allocation8 + $0x388] sm:$0xff]
    %v941 = vld [vmem:[#allocation8 + $0x390] sm:$0xff]
    %v942 = vld [vmem:[#allocation8 + $0x398] sm:$0xff]
    %v943 = vld [vmem:[#allocation8 + $0x3a0] sm:$0xff]
    %v944 = vld [vmem:[#allocation8 + $0x3a8] sm:$0xff]
    %v945 = vld [vmem:[#allocation8 + $0x3b0] sm:$0xff]
    %v946 = vld [vmem:[#allocation8 + $0x3b8] sm:$0xff]
    %v947 = vld [vmem:[#allocation8 + $0x3c0] sm:$0xff]
    %v948 = vld [vmem:[#allocation8 + $0x3c8] sm:$0xff]
    %v949 = vld [vmem:[#allocation8 + $0x3d0] sm:$0xff]
    %v950 = vld [vmem:[#allocation8 + $0x3d8] sm:$0xff]
    %v951 = vld [vmem:[#allocation8 + $0x3e0] sm:$0xff]
    %v952 = vld [vmem:[#allocation8 + $0x3e8] sm:$0xff]
    %v953 = vld [vmem:[#allocation8 + $0x3f0] sm:$0xff]
    %v954 = vld [vmem:[#allocation8 + $0x3f8] sm:$0xff]
    %v955 = vld [vmem:[#allocation8 + $0x400] sm:$0xff]
    %v956 = vld [vmem:[#allocation8 + $0x408] sm:$0xff]
    %v957 = vld [vmem:[#allocation8 + $0x410] sm:$0xff]
    %v958 = vld [vmem:[#allocation8 + $0x418] sm:$0xff]
    %v959 = vld [vmem:[#allocation8 + $0x420] sm:$0xff]
    %v960 = vld [vmem:[#allocation8 + $0x428] sm:$0xff]
    %v961 = vld [vmem:[#allocation8 + $0x430] sm:$0xff]
    %v962 = vld [vmem:[#allocation8 + $0x438] sm:$0xff]
    %v963 = vld [vmem:[#allocation8 + $0x440] sm:$0xff]
    %v964 = vld [vmem:[#allocation8 + $0x448] sm:$0xff]
    %v965 = vld [vmem:[#allocation8 + $0x450] sm:$0xff]
    %v966 = vld [vmem:[#allocation8 + $0x458] sm:$0xff]
    %v967 = vld [vmem:[#allocation8 + $0x460] sm:$0xff]
    %v968 = vld [vmem:[#allocation8 + $0x468] sm:$0xff]
    %v969 = vld [vmem:[#allocation8 + $0x470] sm:$0xff]
    %v970 = vld [vmem:[#allocation8 + $0x478] sm:$0xff]
    %v971 = vld [vmem:[#allocation8 + $0x480] sm:$0xff]
    %v972 = vld [vmem:[#allocation8 + $0x488] sm:$0xff]
    %v973 = vld [vmem:[#allocation8 + $0x490] sm:$0xff]
    %v974 = vld [vmem:[#allocation8 + $0x498] sm:$0xff]
    %v975 = vld [vmem:[#allocation8 + $0x4a0] sm:$0xff]
    %v976 = vld [vmem:[#allocation8 + $0x4a8] sm:$0xff]
    %v977 = vld [vmem:[#allocation8 + $0x4b0] sm:$0xff]
    %v978 = vld [vmem:[#allocation8 + $0x4b8] sm:$0xff]
    %v979 = vld [vmem:[#allocation8 + $0x4c0] sm:$0xff]
    %v980 = vld [vmem:[#allocation8 + $0x4c8] sm:$0xff]
    %v981 = vld [vmem:[#allocation8 + $0x4d0] sm:$0xff]
    %v982 = vld [vmem:[#allocation8 + $0x4d8] sm:$0xff]
    %v983 = vld [vmem:[#allocation8 + $0x4e0] sm:$0xff]
    %v984 = vld [vmem:[#allocation8 + $0x4e8] sm:$0xff]
    %v985 = vld [vmem:[#allocation8 + $0x4f0] sm:$0xff]
    %v986 = vld [vmem:[#allocation8 + $0x4f8] sm:$0xff]
    %v987 = vld [vmem:[#allocation8 + $0x500] sm:$0xff]
    %v988 = vld [vmem:[#allocation8 + $0x508] sm:$0xff]
    %v989 = vld [vmem:[#allocation8 + $0x510] sm:$0xff]
    %v990 = vld [vmem:[#allocation8 + $0x518] sm:$0xff]
    %v991 = vld [vmem:[#allocation8 + $0x520] sm:$0xff]
    %v992 = vld [vmem:[#allocation8 + $0x528] sm:$0xff]
    %v993 = vld [vmem:[#allocation8 + $0x530] sm:$0xff]
    %v994 = vld [vmem:[#allocation8 + $0x538] sm:$0xff]
    %v995 = vld [vmem:[#allocation8 + $0x540] sm:$0xff]
    %v996 = vld [vmem:[#allocation8 + $0x548] sm:$0xff]
    %v997 = vld [vmem:[#allocation8 + $0x550] sm:$0xff]
    %v998 = vld [vmem:[#allocation8 + $0x558] sm:$0xff]
    %v999 = vld [vmem:[#allocation8 + $0x560] sm:$0xff]
    %v1000 = vld [vmem:[#allocation8 + $0x568] sm:$0xff]
    %v1001 = vld [vmem:[#allocation8 + $0x570] sm:$0xff]
    %v1002 = vld [vmem:[#allocation8 + $0x578] sm:$0xff]
    %v1003 = vld [vmem:[#allocation8 + $0x580] sm:$0xff]
    %v1004 = vld [vmem:[#allocation8 + $0x588] sm:$0xff]
    %v1005 = vld [vmem:[#allocation8 + $0x590] sm:$0xff]
    %v1006 = vld [vmem:[#allocation8 + $0x598] sm:$0xff]
    %v1007 = vld [vmem:[#allocation8 + $0x5a0] sm:$0xff]
    %v1008 = vld [vmem:[#allocation8 + $0x5a8] sm:$0xff]
    %v1009 = vld [vmem:[#allocation8 + $0x5b0] sm:$0xff]
    %v1010 = vld [vmem:[#allocation8 + $0x5b8] sm:$0xff]
    %v1011 = vld [vmem:[#allocation8 + $0x5c0] sm:$0xff]
    %v1012 = vld [vmem:[#allocation8 + $0x5c8] sm:$0xff]
    %v1013 = vld [vmem:[#allocation8 + $0x5d0] sm:$0xff]
    %v1014 = vld [vmem:[#allocation8 + $0x5d8] sm:$0xff]
    %v1015 = vld [vmem:[#allocation8 + $0x5e0] sm:$0xff]
    %v1016 = vld [vmem:[#allocation8 + $0x5e8] sm:$0xff]
    %v1017 = vld [vmem:[#allocation8 + $0x5f0] sm:$0xff]
    %v1018 = vld [vmem:[#allocation8 + $0x5f8] sm:$0xff]
    %v1019 = vld [vmem:[#allocation8 + $0x600] sm:$0xff]
    %v1020 = vld [vmem:[#allocation8 + $0x608] sm:$0xff]
    %v1021 = vld [vmem:[#allocation8 + $0x610] sm:$0xff]
    %v1022 = vld [vmem:[#allocation8 + $0x618] sm:$0xff]
    %v1023 = vld [vmem:[#allocation8 + $0x620] sm:$0xff]
    %v1024 = vld [vmem:[#allocation8 + $0x628] sm:$0xff]
    %v1025 = vld [vmem:[#allocation8 + $0x630] sm:$0xff]
    %v1026 = vld [vmem:[#allocation8 + $0x638] sm:$0xff]
    %v1027 = vld [vmem:[#allocation8 + $0x640] sm:$0xff]
    %v1028 = vld [vmem:[#allocation8 + $0x648] sm:$0xff]
    %v1029 = vld [vmem:[#allocation8 + $0x650] sm:$0xff]
    %v1030 = vld [vmem:[#allocation8 + $0x658] sm:$0xff]
    %v1031 = vld [vmem:[#allocation8 + $0x660] sm:$0xff]
    %v1032 = vld [vmem:[#allocation8 + $0x668] sm:$0xff]
    %v1033 = vld [vmem:[#allocation8 + $0x670] sm:$0xff]
    %v1034 = vld [vmem:[#allocation8 + $0x678] sm:$0xff]
    %v1035 = vld [vmem:[#allocation8 + $0x680] sm:$0xff]
    %v1036 = vld [vmem:[#allocation8 + $0x688] sm:$0xff]
    %v1037 = vld [vmem:[#allocation8 + $0x690] sm:$0xff]
    %v1038 = vld [vmem:[#allocation8 + $0x698] sm:$0xff]
    %v1039 = vld [vmem:[#allocation8 + $0x6a0] sm:$0xff]
    %v1040 = vld [vmem:[#allocation8 + $0x6a8] sm:$0xff]
    %v1041 = vld [vmem:[#allocation8 + $0x6b0] sm:$0xff]
    %v1042 = vld [vmem:[#allocation8 + $0x6b8] sm:$0xff]
    %v1043 = vld [vmem:[#allocation8 + $0x6c0] sm:$0xff]
    %v1044 = vld [vmem:[#allocation8 + $0x6c8] sm:$0xff]
    %v1045 = vld [vmem:[#allocation8 + $0x6d0] sm:$0xff]
    %v1046 = vld [vmem:[#allocation8 + $0x6d8] sm:$0xff]
    %v1047 = vld [vmem:[#allocation8 + $0x6e0] sm:$0xff]
    %v1048 = vld [vmem:[#allocation8 + $0x6e8] sm:$0xff]
    %v1049 = vld [vmem:[#allocation8 + $0x6f0] sm:$0xff]
    %v1050 = vld [vmem:[#allocation8 + $0x6f8] sm:$0xff]
    %v1051 = vld [vmem:[#allocation8 + $0x700] sm:$0xff]
    %v1052 = vld [vmem:[#allocation8 + $0x708] sm:$0xff]
    %v1053 = vld [vmem:[#allocation8 + $0x710] sm:$0xff]
    %v1054 = vld [vmem:[#allocation8 + $0x718] sm:$0xff]
    %v1055 = vld [vmem:[#allocation8 + $0x720] sm:$0xff]
    %v1056 = vld [vmem:[#allocation8 + $0x728] sm:$0xff]
    %v1057 = vld [vmem:[#allocation8 + $0x730] sm:$0xff]
    %v1058 = vld [vmem:[#allocation8 + $0x738] sm:$0xff]
    %v1059 = vld [vmem:[#allocation8 + $0x740] sm:$0xff]
    %v1060 = vld [vmem:[#allocation8 + $0x748] sm:$0xff]
    %v1061 = vld [vmem:[#allocation8 + $0x750] sm:$0xff]
    %v1062 = vld [vmem:[#allocation8 + $0x758] sm:$0xff]
    %v1063 = vld [vmem:[#allocation8 + $0x760] sm:$0xff]
    %v1064 = vld [vmem:[#allocation8 + $0x768] sm:$0xff]
    %v1065 = vld [vmem:[#allocation8 + $0x770] sm:$0xff]
    %v1066 = vld [vmem:[#allocation8 + $0x778] sm:$0xff]
    %v1067 = vld [vmem:[#allocation8 + $0x780] sm:$0xff]
    %v1068 = vld [vmem:[#allocation8 + $0x788] sm:$0xff]
    %v1069 = vld [vmem:[#allocation8 + $0x790] sm:$0xff]
    %v1070 = vld [vmem:[#allocation8 + $0x798] sm:$0xff]
    %v1071 = vld [vmem:[#allocation8 + $0x7a0] sm:$0xff]
    %v1072 = vld [vmem:[#allocation8 + $0x7a8] sm:$0xff]
    %v1073 = vld [vmem:[#allocation8 + $0x7b0] sm:$0xff]
    %v1074 = vld [vmem:[#allocation8 + $0x7b8] sm:$0xff]
    %v1075 = vld [vmem:[#allocation8 + $0x7c0] sm:$0xff]
    %v1076 = vld [vmem:[#allocation8 + $0x7c8] sm:$0xff]
    %v1077 = vld [vmem:[#allocation8 + $0x7d0] sm:$0xff]
    %v1078 = vld [vmem:[#allocation8 + $0x7d8] sm:$0xff]
    %v1079 = vld [vmem:[#allocation8 + $0x7e0] sm:$0xff]
    %v1080 = vld [vmem:[#allocation8 + $0x7e8] sm:$0xff]
    %v1081 = vld [vmem:[#allocation8 + $0x7f0] sm:$0xff]
    %v1082 = vld [vmem:[#allocation8 + $0x7f8] sm:$0xff]
    %v1083 = vld [vmem:[#allocation10] sm:$0xff]
    %v1084 = vld [vmem:[#allocation10 + $0x8] sm:$0xff]
    %v1087 = vlaneseq
    %v1088 = vshrl.u32 %v1087, 7
    %v1089 = vsub.s32 0, %v1088
    %v1090 = vrot.slane %v1083, %v1089
    %v1091 = vlaneseq
    %v1092 = vshrl.u32 %v1091, 7
    %v1093 = vsub.s32 1, %v1092
    %v1094 = vrot.slane %v1083, %v1093
    %v1095 = vlaneseq
    %v1096 = vshrl.u32 %v1095, 7
    %v1097 = vsub.s32 2, %v1096
    %v1098 = vrot.slane %v1083, %v1097
    %v1099 = vlaneseq
    %v1100 = vshrl.u32 %v1099, 7
    %v1101 = vsub.s32 3, %v1100
    %v1102 = vrot.slane %v1083, %v1101
    %v1103 = vlaneseq
    %v1104 = vshrl.u32 %v1103, 7
    %v1105 = vsub.s32 4, %v1104
    %v1106 = vrot.slane %v1083, %v1105
    %v1107 = vlaneseq
    %v1108 = vshrl.u32 %v1107, 7
    %v1109 = vsub.s32 5, %v1108
    %v1110 = vrot.slane %v1083, %v1109
    %v1111 = vlaneseq
    %v1112 = vshrl.u32 %v1111, 7
    %v1113 = vsub.s32 6, %v1112
    %v1114 = vrot.slane %v1083, %v1113
    %v1115 = vlaneseq
    %v1116 = vshrl.u32 %v1115, 7
    %v1117 = vsub.s32 7, %v1116
    %v1118 = vrot.slane %v1083, %v1117
    %v1119 = vlaneseq
    %v1120 = vshrl.u32 %v1119, 7
    %v1121 = vsub.s32 0, %v1120
    %v1122 = vrot.slane %v1084, %v1121
    %v1123 = vlaneseq
    %v1124 = vshrl.u32 %v1123, 7
    %v1125 = vsub.s32 1, %v1124
    %v1126 = vrot.slane %v1084, %v1125
    %v1127 = vlaneseq
    %v1128 = vshrl.u32 %v1127, 7
    %v1129 = vsub.s32 2, %v1128
    %v1130 = vrot.slane %v1084, %v1129
    %v1131 = vlaneseq
    %v1132 = vshrl.u32 %v1131, 7
    %v1133 = vsub.s32 3, %v1132
    %v1134 = vrot.slane %v1084, %v1133
    %v1135 = vlaneseq
    %v1136 = vshrl.u32 %v1135, 7
    %v1137 = vsub.s32 4, %v1136
    %v1138 = vrot.slane %v1084, %v1137
    %v1139 = vlaneseq
    %v1140 = vshrl.u32 %v1139, 7
    %v1141 = vsub.s32 5, %v1140
    %v1142 = vrot.slane %v1084, %v1141
    %v1143 = vlaneseq
    %v1144 = vshrl.u32 %v1143, 7
    %v1145 = vsub.s32 6, %v1144
    %v1146 = vrot.slane %v1084, %v1145
    %v1147 = vlaneseq
    %v1148 = vshrl.u32 %v1147, 7
    %v1149 = vsub.s32 7, %v1148
    %v1150 = vrot.slane %v1084, %v1149
    %1167 = vmatprep.subr.mxu0 %v1068
    %1168 = vmatpush1.msra.mxu0 %v1067
    %1169 = vmatprep.subr.mxu0 %v1052
    %1170 = vmatpush1.msra.mxu0 %v1051
    %1171 = vmatprep.subr.mxu0 %v1036
    %1172 = vmatpush1.msra.mxu0 %v1035
    %1173 = vmatprep.subr.mxu0 %v1020
    %1174 = vmatpush1.msra.mxu0 %v1019
    %1175 = vmatprep.subr.mxu0 %v1004
    %1176 = vmatpush1.msra.mxu0 %v1003
    %1177 = vmatprep.subr.mxu0 %v988
    %1178 = vmatpush1.msra.mxu0 %v987
    %1179 = vmatprep.subr.mxu0 %v972
    %1180 = vmatpush1.msra.mxu0 %v971
    %1181 = vmatprep.subr.mxu0 %v956
    %1182 = vmatpush1.msra.mxu0 %v955
    %1183 = vmatprep.subr.mxu0 %v940
    %1184 = vmatpush1.msra.mxu0 %v939
    %1185 = vmatprep.subr.mxu0 %v924
    %1186 = vmatpush1.msra.mxu0 %v923
    %1187 = vmatprep.subr.mxu0 %v908
    %1188 = vmatpush1.msra.mxu0 %v907
    %1189 = vmatprep.subr.mxu0 %v892
    %1190 = vmatpush1.msra.mxu0 %v891
    %1191 = vmatprep.subr.mxu0 %v876
    %1192 = vmatpush1.msra.mxu0 %v875
    %1193 = vmatprep.subr.mxu0 %v860
    %1194 = vmatpush1.msra.mxu0 %v859
    %1195 = vmatprep.subr.mxu0 %v844
    %1196 = vmatpush1.msra.mxu0 %v843
    %1197 = vmatprep.subr.mxu0 %v828
    %1198 = vmatpush1.msra.mxu0 %v827
    %1199 = vmatprep.subr.mxu0 0.0
    %1200 = vmatpush2.msra.mxu0 0.0
    %1201 = vmatprep.subr.mxu0 0.0
    %1202 = vmatpush2.msra.mxu0 0.0
    %1203 = vmatprep.subr.mxu0 0.0
    %1204 = vmatpush2.msra.mxu0 0.0
    %1205 = vmatprep.subr.mxu0 0.0
    %1206 = vmatpush2.msra.mxu0 0.0
    %1207 = vmatprep.subr.mxu0 0.0
    %1208 = vmatpush2.msra.mxu0 0.0
    %1209 = vmatprep.subr.mxu0 0.0
    %1210 = vmatpush2.msra.mxu0 0.0
    %1211 = vmatprep.subr.mxu0 0.0
    %1212 = vmatpush2.msra.mxu0 0.0
    %1213 = vmatprep.subr.mxu0 0.0
    %1214 = vmatpush2.msra.mxu0 0.0
    %1215 = vmatprep.subr.mxu0 0.0
    %1216 = vmatpush2.msra.mxu0 0.0
    %1217 = vmatprep.subr.mxu0 0.0
    %1218 = vmatpush2.msra.mxu0 0.0
    %1219 = vmatprep.subr.mxu0 0.0
    %1220 = vmatpush2.msra.mxu0 0.0
    %1221 = vmatprep.subr.mxu0 0.0
    %1222 = vmatpush2.msra.mxu0 0.0
    %1223 = vmatprep.subr.mxu0 0.0
    %1224 = vmatpush2.msra.mxu0 0.0
    %1225 = vmatprep.subr.mxu0 0.0
    %1226 = vmatpush2.msra.mxu0 0.0
    %1227 = vmatprep.subr.mxu0 0.0
    %1228 = vmatpush2.msra.mxu0 0.0
    %1229 = vmatprep.subr.mxu0 0.0
    %1230 = vmatpush2.msra.mxu0 0.0
    %1231 = vmatprep.mubr.f32.mxu0 0.0
    %1232 = vmatmul.mubr.f32.gmra.mxu0 %v826
    %v1233 = vpop.f32.mrf.mxu0
    %v1234 = vadd.f32 %v1090, %v1233
    %v1235 = vpop.f32.mrf.mxu0
    %v1236 = vadd.f32 %v1094, %v1235
    %1237 = vdwg.mxu0
    %1238 = vmatprep.subr.mxu0 %v1070
    %1239 = vmatpush1.msra.mxu0 %v1069
    %1240 = vmatprep.subr.mxu0 %v1054
    %1241 = vmatpush1.msra.mxu0 %v1053
    %1242 = vmatprep.subr.mxu0 %v1038
    %1243 = vmatpush1.msra.mxu0 %v1037
    %1244 = vmatprep.subr.mxu0 %v1022
    %1245 = vmatpush1.msra.mxu0 %v1021
    %1246 = vmatprep.subr.mxu0 %v1006
    %1247 = vmatpush1.msra.mxu0 %v1005
    %1248 = vmatprep.subr.mxu0 %v990
    %1249 = vmatpush1.msra.mxu0 %v989
    %1250 = vmatprep.subr.mxu0 %v974
    %1251 = vmatpush1.msra.mxu0 %v973
    %1252 = vmatprep.subr.mxu0 %v958
    %1253 = vmatpush1.msra.mxu0 %v957
    %1254 = vmatprep.subr.mxu0 %v942
    %1255 = vmatpush1.msra.mxu0 %v941
    %1256 = vmatprep.subr.mxu0 %v926
    %1257 = vmatpush1.msra.mxu0 %v925
    %1258 = vmatprep.subr.mxu0 %v910
    %1259 = vmatpush1.msra.mxu0 %v909
    %1260 = vmatprep.subr.mxu0 %v894
    %1261 = vmatpush1.msra.mxu0 %v893
    %1262 = vmatprep.subr.mxu0 %v878
    %1263 = vmatpush1.msra.mxu0 %v877
    %1264 = vmatprep.subr.mxu0 %v862
    %1265 = vmatpush1.msra.mxu0 %v861
    %1266 = vmatprep.subr.mxu0 %v846
    %1267 = vmatpush1.msra.mxu0 %v845
    %1268 = vmatprep.subr.mxu0 %v830
    %1269 = vmatpush1.msra.mxu0 %v829
    %1270 = vmatprep.subr.mxu0 0.0
    %1271 = vmatpush2.msra.mxu0 0.0
    %1272 = vmatprep.subr.mxu0 0.0
    %1273 = vmatpush2.msra.mxu0 0.0
    %1274 = vmatprep.subr.mxu0 0.0
    %1275 = vmatpush2.msra.mxu0 0.0
    %1276 = vmatprep.subr.mxu0 0.0
    %1277 = vmatpush2.msra.mxu0 0.0
    %1278 = vmatprep.subr.mxu0 0.0
    %1279 = vmatpush2.msra.mxu0 0.0
    %1280 = vmatprep.subr.mxu0 0.0
    %1281 = vmatpush2.msra.mxu0 0.0
    %1282 = vmatprep.subr.mxu0 0.0
    %1283 = vmatpush2.msra.mxu0 0.0
    %1284 = vmatprep.subr.mxu0 0.0
    %1285 = vmatpush2.msra.mxu0 0.0
    %1286 = vmatprep.subr.mxu0 0.0
    %1287 = vmatpush2.msra.mxu0 0.0
    %1288 = vmatprep.subr.mxu0 0.0
    %1289 = vmatpush2.msra.mxu0 0.0
    %1290 = vmatprep.subr.mxu0 0.0
    %1291 = vmatpush2.msra.mxu0 0.0
    %1292 = vmatprep.subr.mxu0 0.0
    %1293 = vmatpush2.msra.mxu0 0.0
    %1294 = vmatprep.subr.mxu0 0.0
    %1295 = vmatpush2.msra.mxu0 0.0
    %1296 = vmatprep.subr.mxu0 0.0
    %1297 = vmatpush2.msra.mxu0 0.0
    %1298 = vmatprep.subr.mxu0 0.0
    %1299 = vmatpush2.msra.mxu0 0.0
    %1300 = vmatprep.subr.mxu0 0.0
    %1301 = vmatpush2.msra.mxu0 0.0
    %1302 = vmatprep.mubr.f32.mxu0 0.0
    %1303 = vmatmul.mubr.f32.gmra.mxu0 %v826
    %v1304 = vpop.f32.mrf.mxu0
    %v1305 = vadd.f32 %v1098, %v1304
    %v1306 = vpop.f32.mrf.mxu0
    %v1307 = vadd.f32 %v1102, %v1306
    %1308 = vdwg.mxu0
    %1309 = vmatprep.subr.mxu0 %v1072
    %1310 = vmatpush1.msra.mxu0 %v1071
    %1311 = vmatprep.subr.mxu0 %v1056
    %1312 = vmatpush1.msra.mxu0 %v1055
    %1313 = vmatprep.subr.mxu0 %v1040
    %1314 = vmatpush1.msra.mxu0 %v1039
    %1315 = vmatprep.subr.mxu0 %v1024
    %1316 = vmatpush1.msra.mxu0 %v1023
    %1317 = vmatprep.subr.mxu0 %v1008
    %1318 = vmatpush1.msra.mxu0 %v1007
    %1319 = vmatprep.subr.mxu0 %v992
    %1320 = vmatpush1.msra.mxu0 %v991
    %1321 = vmatprep.subr.mxu0 %v976
    %1322 = vmatpush1.msra.mxu0 %v975
    %1323 = vmatprep.subr.mxu0 %v960
    %1324 = vmatpush1.msra.mxu0 %v959
    %1325 = vmatprep.subr.mxu0 %v944
    %1326 = vmatpush1.msra.mxu0 %v943
    %1327 = vmatprep.subr.mxu0 %v928
    %1328 = vmatpush1.msra.mxu0 %v927
    %1329 = vmatprep.subr.mxu0 %v912
    %1330 = vmatpush1.msra.mxu0 %v911
    %1331 = vmatprep.subr.mxu0 %v896
    %1332 = vmatpush1.msra.mxu0 %v895
    %1333 = vmatprep.subr.mxu0 %v880
    %1334 = vmatpush1.msra.mxu0 %v879
    %1335 = vmatprep.subr.mxu0 %v864
    %1336 = vmatpush1.msra.mxu0 %v863
    %1337 = vmatprep.subr.mxu0 %v848
    %1338 = vmatpush1.msra.mxu0 %v847
    %1339 = vmatprep.subr.mxu0 %v832
    %1340 = vmatpush1.msra.mxu0 %v831
    %1341 = vmatprep.subr.mxu0 0.0
    %1342 = vmatpush2.msra.mxu0 0.0
    %1343 = vmatprep.subr.mxu0 0.0
    %1344 = vmatpush2.msra.mxu0 0.0
    %1345 = vmatprep.subr.mxu0 0.0
    %1346 = vmatpush2.msra.mxu0 0.0
    %1347 = vmatprep.subr.mxu0 0.0
    %1348 = vmatpush2.msra.mxu0 0.0
    %1349 = vmatprep.subr.mxu0 0.0
    %1350 = vmatpush2.msra.mxu0 0.0
    %1351 = vmatprep.subr.mxu0 0.0
    %1352 = vmatpush2.msra.mxu0 0.0
    %1353 = vmatprep.subr.mxu0 0.0
    %1354 = vmatpush2.msra.mxu0 0.0
    %1355 = vmatprep.subr.mxu0 0.0
    %1356 = vmatpush2.msra.mxu0 0.0
    %1357 = vmatprep.subr.mxu0 0.0
    %1358 = vmatpush2.msra.mxu0 0.0
    %1359 = vmatprep.subr.mxu0 0.0
    %1360 = vmatpush2.msra.mxu0 0.0
    %1361 = vmatprep.subr.mxu0 0.0
    %1362 = vmatpush2.msra.mxu0 0.0
    %1363 = vmatprep.subr.mxu0 0.0
    %1364 = vmatpush2.msra.mxu0 0.0
    %1365 = vmatprep.subr.mxu0 0.0
    %1366 = vmatpush2.msra.mxu0 0.0
    %1367 = vmatprep.subr.mxu0 0.0
    %1368 = vmatpush2.msra.mxu0 0.0
    %1369 = vmatprep.subr.mxu0 0.0
    %1370 = vmatpush2.msra.mxu0 0.0
    %1371 = vmatprep.subr.mxu0 0.0
    %1372 = vmatpush2.msra.mxu0 0.0
    %1373 = vmatprep.mubr.f32.mxu0 0.0
    %1374 = vmatmul.mubr.f32.gmra.mxu0 %v826
    %v1375 = vpop.f32.mrf.mxu0
    %v1376 = vadd.f32 %v1106, %v1375
    %v1377 = vpop.f32.mrf.mxu0
    %v1378 = vadd.f32 %v1110, %v1377
    %1379 = vdwg.mxu0
    %1380 = vmatprep.subr.mxu0 %v1074
    %1381 = vmatpush1.msra.mxu0 %v1073
    %1382 = vmatprep.subr.mxu0 %v1058
    %1383 = vmatpush1.msra.mxu0 %v1057
    %1384 = vmatprep.subr.mxu0 %v1042
    %1385 = vmatpush1.msra.mxu0 %v1041
    %1386 = vmatprep.subr.mxu0 %v1026
    %1387 = vmatpush1.msra.mxu0 %v1025
    %1388 = vmatprep.subr.mxu0 %v1010
    %1389 = vmatpush1.msra.mxu0 %v1009
    %1390 = vmatprep.subr.mxu0 %v994
    %1391 = vmatpush1.msra.mxu0 %v993
    %1392 = vmatprep.subr.mxu0 %v978
    %1393 = vmatpush1.msra.mxu0 %v977
    %1394 = vmatprep.subr.mxu0 %v962
    %1395 = vmatpush1.msra.mxu0 %v961
    %1396 = vmatprep.subr.mxu0 %v946
    %1397 = vmatpush1.msra.mxu0 %v945
    %1398 = vmatprep.subr.mxu0 %v930
    %1399 = vmatpush1.msra.mxu0 %v929
    %1400 = vmatprep.subr.mxu0 %v914
    %1401 = vmatpush1.msra.mxu0 %v913
    %1402 = vmatprep.subr.mxu0 %v898
    %1403 = vmatpush1.msra.mxu0 %v897
    %1404 = vmatprep.subr.mxu0 %v882
    %1405 = vmatpush1.msra.mxu0 %v881
    %1406 = vmatprep.subr.mxu0 %v866
    %1407 = vmatpush1.msra.mxu0 %v865
    %1408 = vmatprep.subr.mxu0 %v850
    %1409 = vmatpush1.msra.mxu0 %v849
    %1410 = vmatprep.subr.mxu0 %v834
    %1411 = vmatpush1.msra.mxu0 %v833
    %1412 = vmatprep.subr.mxu0 0.0
    %1413 = vmatpush2.msra.mxu0 0.0
    %1414 = vmatprep.subr.mxu0 0.0
    %1415 = vmatpush2.msra.mxu0 0.0
    %1416 = vmatprep.subr.mxu0 0.0
    %1417 = vmatpush2.msra.mxu0 0.0
    %1418 = vmatprep.subr.mxu0 0.0
    %1419 = vmatpush2.msra.mxu0 0.0
    %1420 = vmatprep.subr.mxu0 0.0
    %1421 = vmatpush2.msra.mxu0 0.0
    %1422 = vmatprep.subr.mxu0 0.0
    %1423 = vmatpush2.msra.mxu0 0.0
    %1424 = vmatprep.subr.mxu0 0.0
    %1425 = vmatpush2.msra.mxu0 0.0
    %1426 = vmatprep.subr.mxu0 0.0
    %1427 = vmatpush2.msra.mxu0 0.0
    %1428 = vmatprep.subr.mxu0 0.0
    %1429 = vmatpush2.msra.mxu0 0.0
    %1430 = vmatprep.subr.mxu0 0.0
    %1431 = vmatpush2.msra.mxu0 0.0
    %1432 = vmatprep.subr.mxu0 0.0
    %1433 = vmatpush2.msra.mxu0 0.0
    %1434 = vmatprep.subr.mxu0 0.0
    %1435 = vmatpush2.msra.mxu0 0.0
    %1436 = vmatprep.subr.mxu0 0.0
    %1437 = vmatpush2.msra.mxu0 0.0
    %1438 = vmatprep.subr.mxu0 0.0
    %1439 = vmatpush2.msra.mxu0 0.0
    %1440 = vmatprep.subr.mxu0 0.0
    %1441 = vmatpush2.msra.mxu0 0.0
    %1442 = vmatprep.subr.mxu0 0.0
    %1443 = vmatpush2.msra.mxu0 0.0
    %1444 = vmatprep.mubr.f32.mxu0 0.0
    %1445 = vmatmul.mubr.f32.gmra.mxu0 %v826
    %v1446 = vpop.f32.mrf.mxu0
    %v1447 = vadd.f32 %v1114, %v1446
    %v1448 = vpop.f32.mrf.mxu0
    %v1449 = vadd.f32 %v1118, %v1448
    %1450 = vdwg.mxu0
    %1451 = vmatprep.subr.mxu0 %v1076
    %1452 = vmatpush1.msra.mxu0 %v1075
    %1453 = vmatprep.subr.mxu0 %v1060
    %1454 = vmatpush1.msra.mxu0 %v1059
    %1455 = vmatprep.subr.mxu0 %v1044
    %1456 = vmatpush1.msra.mxu0 %v1043
    %1457 = vmatprep.subr.mxu0 %v1028
    %1458 = vmatpush1.msra.mxu0 %v1027
    %1459 = vmatprep.subr.mxu0 %v1012
    %1460 = vmatpush1.msra.mxu0 %v1011
    %1461 = vmatprep.subr.mxu0 %v996
    %1462 = vmatpush1.msra.mxu0 %v995
    %1463 = vmatprep.subr.mxu0 %v980
    %1464 = vmatpush1.msra.mxu0 %v979
    %1465 = vmatprep.subr.mxu0 %v964
    %1466 = vmatpush1.msra.mxu0 %v963
    %1467 = vmatprep.subr.mxu0 %v948
    %1468 = vmatpush1.msra.mxu0 %v947
    %1469 = vmatprep.subr.mxu0 %v932
    %1470 = vmatpush1.msra.mxu0 %v931
    %1471 = vmatprep.subr.mxu0 %v916
    %1472 = vmatpush1.msra.mxu0 %v915
    %1473 = vmatprep.subr.mxu0 %v900
    %1474 = vmatpush1.msra.mxu0 %v899
    %1475 = vmatprep.subr.mxu0 %v884
    %1476 = vmatpush1.msra.mxu0 %v883
    %1477 = vmatprep.subr.mxu0 %v868
    %1478 = vmatpush1.msra.mxu0 %v867
    %1479 = vmatprep.subr.mxu0 %v852
    %1480 = vmatpush1.msra.mxu0 %v851
    %1481 = vmatprep.subr.mxu0 %v836
    %1482 = vmatpush1.msra.mxu0 %v835
    %1483 = vmatprep.subr.mxu0 0.0
    %1484 = vmatpush2.msra.mxu0 0.0
    %1485 = vmatprep.subr.mxu0 0.0
    %1486 = vmatpush2.msra.mxu0 0.0
    %1487 = vmatprep.subr.mxu0 0.0
    %1488 = vmatpush2.msra.mxu0 0.0
    %1489 = vmatprep.subr.mxu0 0.0
    %1490 = vmatpush2.msra.mxu0 0.0
    %1491 = vmatprep.subr.mxu0 0.0
    %1492 = vmatpush2.msra.mxu0 0.0
    %1493 = vmatprep.subr.mxu0 0.0
    %1494 = vmatpush2.msra.mxu0 0.0
    %1495 = vmatprep.subr.mxu0 0.0
    %1496 = vmatpush2.msra.mxu0 0.0
    %1497 = vmatprep.subr.mxu0 0.0
    %1498 = vmatpush2.msra.mxu0 0.0
    %1499 = vmatprep.subr.mxu0 0.0
    %1500 = vmatpush2.msra.mxu0 0.0
    %1501 = vmatprep.subr.mxu0 0.0
    %1502 = vmatpush2.msra.mxu0 0.0
    %1503 = vmatprep.subr.mxu0 0.0
    %1504 = vmatpush2.msra.mxu0 0.0
    %1505 = vmatprep.subr.mxu0 0.0
    %1506 = vmatpush2.msra.mxu0 0.0
    %1507 = vmatprep.subr.mxu0 0.0
    %1508 = vmatpush2.msra.mxu0 0.0
    %1509 = vmatprep.subr.mxu0 0.0
    %1510 = vmatpush2.msra.mxu0 0.0
    %1511 = vmatprep.subr.mxu0 0.0
    %1512 = vmatpush2.msra.mxu0 0.0
    %1513 = vmatprep.subr.mxu0 0.0
    %1514 = vmatpush2.msra.mxu0 0.0
    %1515 = vmatprep.mubr.f32.mxu0 0.0
    %1516 = vmatmul.mubr.f32.gmra.mxu0 %v826
    %v1517 = vpop.f32.mrf.mxu0
    %v1518 = vadd.f32 %v1122, %v1517
    %v1519 = vpop.f32.mrf.mxu0
    %v1520 = vadd.f32 %v1126, %v1519
    %1521 = vdwg.mxu0
    %1522 = vmatprep.subr.mxu0 %v1078
    %1523 = vmatpush1.msra.mxu0 %v1077
    %1524 = vmatprep.subr.mxu0 %v1062
    %1525 = vmatpush1.msra.mxu0 %v1061
    %1526 = vmatprep.subr.mxu0 %v1046
    %1527 = vmatpush1.msra.mxu0 %v1045
    %1528 = vmatprep.subr.mxu0 %v1030
    %1529 = vmatpush1.msra.mxu0 %v1029
    %1530 = vmatprep.subr.mxu0 %v1014
    %1531 = vmatpush1.msra.mxu0 %v1013
    %1532 = vmatprep.subr.mxu0 %v998
    %1533 = vmatpush1.msra.mxu0 %v997
    %1534 = vmatprep.subr.mxu0 %v982
    %1535 = vmatpush1.msra.mxu0 %v981
    %1536 = vmatprep.subr.mxu0 %v966
    %1537 = vmatpush1.msra.mxu0 %v965
    %1538 = vmatprep.subr.mxu0 %v950
    %1539 = vmatpush1.msra.mxu0 %v949
    %1540 = vmatprep.subr.mxu0 %v934
    %1541 = vmatpush1.msra.mxu0 %v933
    %1542 = vmatprep.subr.mxu0 %v918
    %1543 = vmatpush1.msra.mxu0 %v917
    %1544 = vmatprep.subr.mxu0 %v902
    %1545 = vmatpush1.msra.mxu0 %v901
    %1546 = vmatprep.subr.mxu0 %v886
    %1547 = vmatpush1.msra.mxu0 %v885
    %1548 = vmatprep.subr.mxu0 %v870
    %1549 = vmatpush1.msra.mxu0 %v869
    %1550 = vmatprep.subr.mxu0 %v854
    %1551 = vmatpush1.msra.mxu0 %v853
    %1552 = vmatprep.subr.mxu0 %v838
    %1553 = vmatpush1.msra.mxu0 %v837
    %1554 = vmatprep.subr.mxu0 0.0
    %1555 = vmatpush2.msra.mxu0 0.0
    %1556 = vmatprep.subr.mxu0 0.0
    %1557 = vmatpush2.msra.mxu0 0.0
    %1558 = vmatprep.subr.mxu0 0.0
    %1559 = vmatpush2.msra.mxu0 0.0
    %1560 = vmatprep.subr.mxu0 0.0
    %1561 = vmatpush2.msra.mxu0 0.0
    %1562 = vmatprep.subr.mxu0 0.0
    %1563 = vmatpush2.msra.mxu0 0.0
    %1564 = vmatprep.subr.mxu0 0.0
    %1565 = vmatpush2.msra.mxu0 0.0
    %1566 = vmatprep.subr.mxu0 0.0
    %1567 = vmatpush2.msra.mxu0 0.0
    %1568 = vmatprep.subr.mxu0 0.0
    %1569 = vmatpush2.msra.mxu0 0.0
    %1570 = vmatprep.subr.mxu0 0.0
    %1571 = vmatpush2.msra.mxu0 0.0
    %1572 = vmatprep.subr.mxu0 0.0
    %1573 = vmatpush2.msra.mxu0 0.0
    %1574 = vmatprep.subr.mxu0 0.0
    %1575 = vmatpush2.msra.mxu0 0.0
    %1576 = vmatprep.subr.mxu0 0.0
    %1577 = vmatpush2.msra.mxu0 0.0
    %1578 = vmatprep.subr.mxu0 0.0
    %1579 = vmatpush2.msra.mxu0 0.0
    %1580 = vmatprep.subr.mxu0 0.0
    %1581 = vmatpush2.msra.mxu0 0.0
    %1582 = vmatprep.subr.mxu0 0.0
    %1583 = vmatpush2.msra.mxu0 0.0
    %1584 = vmatprep.subr.mxu0 0.0
    %1585 = vmatpush2.msra.mxu0 0.0
    %1586 = vmatprep.mubr.f32.mxu0 0.0
    %1587 = vmatmul.mubr.f32.gmra.mxu0 %v826
    %v1588 = vpop.f32.mrf.mxu0
    %v1589 = vadd.f32 %v1130, %v1588
    %v1590 = vpop.f32.mrf.mxu0
    %v1591 = vadd.f32 %v1134, %v1590
    %1592 = vdwg.mxu0
    %1593 = vmatprep.subr.mxu0 %v1080
    %1594 = vmatpush1.msra.mxu0 %v1079
    %1595 = vmatprep.subr.mxu0 %v1064
    %1596 = vmatpush1.msra.mxu0 %v1063
    %1597 = vmatprep.subr.mxu0 %v1048
    %1598 = vmatpush1.msra.mxu0 %v1047
    %1599 = vmatprep.subr.mxu0 %v1032
    %1600 = vmatpush1.msra.mxu0 %v1031
    %1601 = vmatprep.subr.mxu0 %v1016
    %1602 = vmatpush1.msra.mxu0 %v1015
    %1603 = vmatprep.subr.mxu0 %v1000
    %1604 = vmatpush1.msra.mxu0 %v999
    %1605 = vmatprep.subr.mxu0 %v984
    %1606 = vmatpush1.msra.mxu0 %v983
    %1607 = vmatprep.subr.mxu0 %v968
    %1608 = vmatpush1.msra.mxu0 %v967
    %1609 = vmatprep.subr.mxu0 %v952
    %1610 = vmatpush1.msra.mxu0 %v951
    %1611 = vmatprep.subr.mxu0 %v936
    %1612 = vmatpush1.msra.mxu0 %v935
    %1613 = vmatprep.subr.mxu0 %v920
    %1614 = vmatpush1.msra.mxu0 %v919
    %1615 = vmatprep.subr.mxu0 %v904
    %1616 = vmatpush1.msra.mxu0 %v903
    %1617 = vmatprep.subr.mxu0 %v888
    %1618 = vmatpush1.msra.mxu0 %v887
    %1619 = vmatprep.subr.mxu0 %v872
    %1620 = vmatpush1.msra.mxu0 %v871
    %1621 = vmatprep.subr.mxu0 %v856
    %1622 = vmatpush1.msra.mxu0 %v855
    %1623 = vmatprep.subr.mxu0 %v840
    %1624 = vmatpush1.msra.mxu0 %v839
    %1625 = vmatprep.subr.mxu0 0.0
    %1626 = vmatpush2.msra.mxu0 0.0
    %1627 = vmatprep.subr.mxu0 0.0
    %1628 = vmatpush2.msra.mxu0 0.0
    %1629 = vmatprep.subr.mxu0 0.0
    %1630 = vmatpush2.msra.mxu0 0.0
    %1631 = vmatprep.subr.mxu0 0.0
    %1632 = vmatpush2.msra.mxu0 0.0
    %1633 = vmatprep.subr.mxu0 0.0
    %1634 = vmatpush2.msra.mxu0 0.0
    %1635 = vmatprep.subr.mxu0 0.0
    %1636 = vmatpush2.msra.mxu0 0.0
    %1637 = vmatprep.subr.mxu0 0.0
    %1638 = vmatpush2.msra.mxu0 0.0
    %1639 = vmatprep.subr.mxu0 0.0
    %1640 = vmatpush2.msra.mxu0 0.0
    %1641 = vmatprep.subr.mxu0 0.0
    %1642 = vmatpush2.msra.mxu0 0.0
    %1643 = vmatprep.subr.mxu0 0.0
    %1644 = vmatpush2.msra.mxu0 0.0
    %1645 = vmatprep.subr.mxu0 0.0
    %1646 = vmatpush2.msra.mxu0 0.0
    %1647 = vmatprep.subr.mxu0 0.0
    %1648 = vmatpush2.msra.mxu0 0.0
    %1649 = vmatprep.subr.mxu0 0.0
    %1650 = vmatpush2.msra.mxu0 0.0
    %1651 = vmatprep.subr.mxu0 0.0
    %1652 = vmatpush2.msra.mxu0 0.0
    %1653 = vmatprep.subr.mxu0 0.0
    %1654 = vmatpush2.msra.mxu0 0.0
    %1655 = vmatprep.subr.mxu0 0.0
    %1656 = vmatpush2.msra.mxu0 0.0
    %1657 = vmatprep.mubr.f32.mxu0 0.0
    %1658 = vmatmul.mubr.f32.gmra.mxu0 %v826
    %v1659 = vpop.f32.mrf.mxu0
    %v1660 = vadd.f32 %v1138, %v1659
    %v1661 = vpop.f32.mrf.mxu0
    %v1662 = vadd.f32 %v1142, %v1661
    %1663 = vdwg.mxu0
    %1664 = vmatprep.subr.mxu0 %v1082
    %1665 = vmatpush1.msra.mxu0 %v1081
    %1666 = vmatprep.subr.mxu0 %v1066
    %1667 = vmatpush1.msra.mxu0 %v1065
    %1668 = vmatprep.subr.mxu0 %v1050
    %1669 = vmatpush1.msra.mxu0 %v1049
    %1670 = vmatprep.subr.mxu0 %v1034
    %1671 = vmatpush1.msra.mxu0 %v1033
    %1672 = vmatprep.subr.mxu0 %v1018
    %1673 = vmatpush1.msra.mxu0 %v1017
    %1674 = vmatprep.subr.mxu0 %v1002
    %1675 = vmatpush1.msra.mxu0 %v1001
    %1676 = vmatprep.subr.mxu0 %v986
    %1677 = vmatpush1.msra.mxu0 %v985
    %1678 = vmatprep.subr.mxu0 %v970
    %1679 = vmatpush1.msra.mxu0 %v969
    %1680 = vmatprep.subr.mxu0 %v954
    %1681 = vmatpush1.msra.mxu0 %v953
    %1682 = vmatprep.subr.mxu0 %v938
    %1683 = vmatpush1.msra.mxu0 %v937
    %1684 = vmatprep.subr.mxu0 %v922
    %1685 = vmatpush1.msra.mxu0 %v921
    %1686 = vmatprep.subr.mxu0 %v906
    %1687 = vmatpush1.msra.mxu0 %v905
    %1688 = vmatprep.subr.mxu0 %v890
    %1689 = vmatpush1.msra.mxu0 %v889
    %1690 = vmatprep.subr.mxu0 %v874
    %1691 = vmatpush1.msra.mxu0 %v873
    %1692 = vmatprep.subr.mxu0 %v858
    %1693 = vmatpush1.msra.mxu0 %v857
    %1694 = vmatprep.subr.mxu0 %v842
    %1695 = vmatpush1.msra.mxu0 %v841
    %1696 = vmatprep.subr.mxu0 0.0
    %1697 = vmatpush2.msra.mxu0 0.0
    %1698 = vmatprep.subr.mxu0 0.0
    %1699 = vmatpush2.msra.mxu0 0.0
    %1700 = vmatprep.subr.mxu0 0.0
    %1701 = vmatpush2.msra.mxu0 0.0
    %1702 = vmatprep.subr.mxu0 0.0
    %1703 = vmatpush2.msra.mxu0 0.0
    %1704 = vmatprep.subr.mxu0 0.0
    %1705 = vmatpush2.msra.mxu0 0.0
    %1706 = vmatprep.subr.mxu0 0.0
    %1707 = vmatpush2.msra.mxu0 0.0
    %1708 = vmatprep.subr.mxu0 0.0
    %1709 = vmatpush2.msra.mxu0 0.0
    %1710 = vmatprep.subr.mxu0 0.0
    %1711 = vmatpush2.msra.mxu0 0.0
    %1712 = vmatprep.subr.mxu0 0.0
    %1713 = vmatpush2.msra.mxu0 0.0
    %1714 = vmatprep.subr.mxu0 0.0
    %1715 = vmatpush2.msra.mxu0 0.0
    %1716 = vmatprep.subr.mxu0 0.0
    %1717 = vmatpush2.msra.mxu0 0.0
    %1718 = vmatprep.subr.mxu0 0.0
    %1719 = vmatpush2.msra.mxu0 0.0
    %1720 = vmatprep.subr.mxu0 0.0
    %1721 = vmatpush2.msra.mxu0 0.0
    %1722 = vmatprep.subr.mxu0 0.0
    %1723 = vmatpush2.msra.mxu0 0.0
    %1724 = vmatprep.subr.mxu0 0.0
    %1725 = vmatpush2.msra.mxu0 0.0
    %1726 = vmatprep.subr.mxu0 0.0
    %1727 = vmatpush2.msra.mxu0 0.0
    %1728 = vmatprep.mubr.f32.mxu0 0.0
    %1729 = vmatmul.mubr.f32.gmra.mxu0 %v826
    %v1730 = vpop.f32.mrf.mxu0
    %v1731 = vadd.f32 %v1146, %v1730
    %v1732 = vpop.f32.mrf.mxu0
    %v1733 = vadd.f32 %v1150, %v1732
    %1734 = vdwg.mxu0
    %1735 = vst [vmem:[#allocation11] sm:$0xff] %v1234
    %1736 = vst [vmem:[#allocation11 + $0x8] sm:$0xff] %v1236
    %1737 = vst [vmem:[#allocation11 + $0x10] sm:$0xff] %v1305
    %1738 = vst [vmem:[#allocation11 + $0x18] sm:$0xff] %v1307
    %1739 = vst [vmem:[#allocation11 + $0x20] sm:$0xff] %v1376
    %1740 = vst [vmem:[#allocation11 + $0x28] sm:$0xff] %v1378
    %1741 = vst [vmem:[#allocation11 + $0x30] sm:$0xff] %v1447
    %1742 = vst [vmem:[#allocation11 + $0x38] sm:$0xff] %v1449
    %1743 = vst [vmem:[#allocation11 + $0x40] sm:$0xff] %v1518
    %1744 = vst [vmem:[#allocation11 + $0x48] sm:$0xff] %v1520
    %1745 = vst [vmem:[#allocation11 + $0x50] sm:$0xff] %v1589
    %1746 = vst [vmem:[#allocation11 + $0x58] sm:$0xff] %v1591
    %1747 = vst [vmem:[#allocation11 + $0x60] sm:$0xff] %v1660
    %1748 = vst [vmem:[#allocation11 + $0x68] sm:$0xff] %v1662
    %1749 = vst [vmem:[#allocation11 + $0x70] sm:$0xff] %v1731
    %1750 = vst [vmem:[#allocation11 + $0x78] sm:$0xff] %v1733
    // Predicated region
    $region42: #{tpu_custom_call.1} parent=1 // pred_check
      _
    $region43: #{tpu_custom_call.1} parent=1 // pred_check_branch
      %1752 = sbr.rel (0) target = $region45
    $region44: #{tpu_custom_call.1} parent=1 // pred_region
      %s1754 = ssub.s32 2048, 2048
      %1755 = vsyncadd [#allocation4], %s1754
      %s1757 = sshll.u32 [#allocation11], 4
      %s1758 = int_to_ptr.vmem [resolvable:$true] %s1757
      %1760 = dma.vmem_to_hbm [thread:$0]  %s1758, 2048, %s5, [#allocation4]
    $region45: #{tpu_custom_call.1} parent=1 // pred_fallthru
      _
    // Predicated region
    $region46: #{tpu_custom_call.1} parent=1 // pred_check
      _
    $region47: #{tpu_custom_call.1} parent=1 // pred_check_branch
      %1762 = sbr.rel (0) target = $region49
    $region48: #{tpu_custom_call.1} parent=1 // pred_region
      %1763 = dma.done [#allocation4], 2048
    $region49: #{tpu_custom_call.1} parent=1 // pred_fallthru
      _
    %1764 = vsyncpa [#allocation3], 1
    %1765 = vsyncpa [#allocation6], 1
    %1766 = vsyncpa [#allocation9], 1
    %1767 = vsyncpa [#allocation4], 1

</llo_original>
